<compile_context>
chip_gen: v7x
topology: tpu7x:2x2x1
jax: 0.10.0
libtpu: 0.0.40
codegen_flags: <defaults>
</compile_context>

<pallas_src>
import functools

import jax
import jax.numpy as jnp
from jax.experimental import pallas as pl
from jax.experimental.pallas import tpu as pltpu


def _round_up(x, m):
    return ((x + m - 1) // m) * m


def _cdiv(a, b):
    return -(-a // b)


# --------------------------------------------------------------------------- #
# Kernel
# --------------------------------------------------------------------------- #
def _gnn_kernel(a_in_ref, a_out_ref, h_ref,
                wf_ref, bf_ref, biah_ref, boah_ref,
                wih_ref, bih_ref,
                out_ref, *, step, adj_on_vpu):
    """Full GNN forward (all `step` GRU updates) for one batch block.

    Shapes inside the kernel (TB = batch block, N = padded nodes, Hp = padded H):
      a_in_ref, a_out_ref : (TB, N, N)     matmul dtype (f32 or bf16)
      h_ref, out_ref      : (TB, N, Hp)    f32
      wf_ref              : (Hp, 5*Hp) = [Win^T | Wout^T | Whh_r^T | Whh_i^T | Whh_n^T]
      bf_ref              : (1, 5*Hp)
      biah_ref, boah_ref  : (1, Hp)
      wih_ref             : (2*Hp, 3*Hp) = w_ih^T with 128-aligned gate segments
      bih_ref             : (1, 3*Hp)
    Every gate segment is a multiple of 128 lanes wide, so all slices below are
    whole-vreg and every VPU/EUP op plus the final store are lane-dense.
    """
    TB, N, Hp = h_ref.shape
    f32 = jnp.float32
    mm_dtype = wf_ref.dtype

    # Loop-invariant loads / broadcasts hoisted out of the step loop
    # (JAX does not CSE broadcasts).
    a_in = a_in_ref[...]
    a_out = a_out_ref[...]
    wf = wf_ref[...]
    bf = bf_ref[...]
    wih = wih_ref[...]
    bih = bih_ref[...]
    bias_in = jnp.broadcast_to(biah_ref[...].reshape(1, 1, Hp), (TB, N, Hp))
    bias_out = jnp.broadcast_to(boah_ref[...].reshape(1, 1, Hp), (TB, N, Hp))

    if adj_on_vpu:
        # Per-m adjacency columns are step-invariant: slice them once.
        a_in_cols = [a_in[:, :, m:m + 1].astype(f32) for m in range(N)]
        a_out_cols = [a_out[:, :, m:m + 1].astype(f32) for m in range(N)]

    def cell(h2):                                       # h2: (TB*N, Hp) f32
        # One fused MXU pass -> [edge_in | edge_out | gh_r | gh_i | gh_n].
        eg = jnp.dot(h2.astype(mm_dtype), wf,
                     preferred_element_type=f32) + bf   # (TB*N, 5Hp)
        edge_in = eg[:, :Hp].reshape(TB, N, Hp)
        edge_out = eg[:, Hp:2 * Hp].reshape(TB, N, Hp)
        gh = eg[:, 2 * Hp:]                             # (TB*N, 3Hp)

        if adj_on_vpu:
            # Tiny (NxN)@(NxHp) contractions as unrolled rank-1 VPU MACs:
            # far below MXU utilization thresholds, so keep them off the MXU.
            inp_in = bias_in
            inp_out = bias_out
            for m in range(N):
                inp_in = inp_in + a_in_cols[m] * edge_in[:, m:m + 1, :]
                inp_out = inp_out + a_out_cols[m] * edge_out[:, m:m + 1, :]
        else:
            # Large-N fallback: batched MXU contraction.
            inp_in = jnp.einsum('bnm,bmh->bnh', a_in, edge_in.astype(mm_dtype),
                                preferred_element_type=f32) + bias_in
            inp_out = jnp.einsum('bnm,bmh->bnh', a_out, edge_out.astype(mm_dtype),
                                 preferred_element_type=f32) + bias_out

        # gi = [input_in | input_out] @ w_ih^T + b_ih — one K = 2*Hp MXU pass
        # (lane concat of two 128-aligned slabs is just vreg placement).
        inputs = jnp.concatenate([inp_in, inp_out], axis=-1).reshape(TB * N, 2 * Hp)
        gi = jnp.dot(inputs.astype(mm_dtype), wih,
                     preferred_element_type=f32) + bih  # (TB*N, 3Hp)

        # Lane-dense GRU epilogue; every slice below is vreg-aligned (Hp % 128 == 0).
        i_r, i_i, i_n = gi[:, :Hp], gi[:, Hp:2 * Hp], gi[:, 2 * Hp:]
        h_r, h_i, h_n = gh[:, :Hp], gh[:, Hp:2 * Hp], gh[:, 2 * Hp:]
        resetgate = jax.nn.sigmoid(i_r + h_r)
        inputgate = jax.nn.sigmoid(i_i + h_i)
        newgate = jnp.tanh(i_n + resetgate * h_n)
        return newgate + inputgate * (h2 - newgate)

    # (TB, N, Hp) -> (TB*N, Hp) merges leading dims only; N is padded to a
    # multiple of 8 in the wrapper so this is a pure view (no relayout).
    h2 = h_ref[...].reshape(TB * N, Hp)
    if step <= 8:
        for _ in range(step):                 # static unroll for small step counts
            h2 = cell(h2)
    else:
        h2 = jax.lax.fori_loop(0, step, lambda _, h: cell(h), h2, unroll=False)
    out_ref[...] = h2.reshape(TB, N, Hp)


# --------------------------------------------------------------------------- #
# VMEM accounting / block sizing
# --------------------------------------------------------------------------- #
def _tile_bytes(shape, dtype):
    """Bytes of a VMEM tile after (sublane, lane) layout padding."""
    itemsize = jnp.dtype(dtype).itemsize
    sublane = {4: 8, 2: 16, 1: 32}.get(itemsize, 8)
    dims = list(shape)
    dims[-1] = _round_up(dims[-1], 128)
    if len(dims) >= 2:
        dims[-2] = _round_up(dims[-2], sublane)
    n = 1
    for d in dims:
        n *= d
    return n * itemsize


def _block_vmem_bytes(tb, Np, Hp, mm_dtype):
    """Conservative VMEM footprint for one batch block of size tb."""
    f32 = jnp.float32
    a_tile = _tile_bytes((tb, Np, Np), mm_dtype)
    h_tile = _tile_bytes((tb, Np, Hp), f32)
    # double-buffered per-block inputs (A_in, A_out, hidden) + output
    io = 2 * (2 * a_tile + h_tile) + 2 * h_tile
    # shared weights / biases (constant index map; budget 2x to stay safe)
    w = 2 * (_tile_bytes((Hp, 5 * Hp), mm_dtype)
             + _tile_bytes((2 * Hp, 3 * Hp), mm_dtype)
             + _tile_bytes((1, 5 * Hp), f32)
             + _tile_bytes((1, 3 * Hp), f32)
             + 2 * _tile_bytes((1, Hp), f32))
    # live in-kernel intermediates (h2, eg, edge_*, inp_*, inputs, gi, gates) plus
    # bf16/f32 copies feeding the MXU — ~20 f32 + ~8 mm_dtype columns of Hp per row.
    rows = _round_up(tb * Np, 8)
    interm = rows * 20 * Hp * 4 + rows * 8 * Hp * jnp.dtype(mm_dtype).itemsize
    return io + w + interm


def _default_vmem_limit_bytes():
    cap = 64 * 1024 * 1024                  # assume v7x (smallest VMEM) if unknown
    try:
        info = pltpu.get_tpu_info()
        cap = int(getattr(info, "vmem_capacity_bytes", cap)) or cap
    except Exception:
        pass
    # ~70% of physical VMEM: v7x(64MiB) -> ~45MiB, v5e/v6e(128MiB) -> ~90MiB.
    return min(int(cap * 0.70), 100 * 1024 * 1024)


def _choose_batch_block(B, Np, Hp, mm_dtype, budget_bytes, min_blocks):
    tb = 1
    for cand in range(1, B + 1):            # footprint is monotone in tb
        if _block_vmem_bytes(cand, Np, Hp, mm_dtype) <= budget_bytes:
            tb = cand
        else:
            break
    if min_blocks > 1 and B >= min_blocks:
        # >=2 blocks: uses both v7x TensorCores and lets block i+1's A DMA
        # overlap block i's compute on v5e (HBM-bound at step=1).
        tb = min(tb, _cdiv(B, min_blocks))
    nblk = _cdiv(B, tb)
    tb = _cdiv(B, nblk)                     # rebalance -> minimal batch padding
    return max(1, tb)


# --------------------------------------------------------------------------- #
# Parameter fusion (128-aligned gate segments)
# --------------------------------------------------------------------------- #
def _fuse_params(params, H, Hp, mm_dtype):
    """Build lane-aligned fused kernel operands from the raw GNN parameters."""
    f32 = jnp.float32
    w_ih = params["w_ih"].astype(f32)                 # (3H, 2H)
    w_hh = params["w_hh"].astype(f32)                 # (3H, H)
    b_ih = params["b_ih"].astype(f32)
    b_hh = params["b_hh"].astype(f32)

    whh_t = w_hh.T                                    # (H, 3H)
    wf = jnp.zeros((Hp, 5 * Hp), f32)
    segs = [params["w_edge_in"].T, params["w_edge_out"].T,
            whh_t[:, :H], whh_t[:, H:2 * H], whh_t[:, 2 * H:]]
    for g, s in enumerate(segs):
        wf = wf.at[:H, g * Hp:g * Hp + H].set(s.astype(f32))

    bf = jnp.zeros((1, 5 * Hp), f32)
    bsegs = [params["b_edge_in"], params["b_edge_out"],
             b_hh[:H], b_hh[H:2 * H], b_hh[2 * H:]]
    for g, s in enumerate(bsegs):
        bf = bf.at[0, g * Hp:g * Hp + H].set(s.astype(f32))

    wih_t = w_ih.T                                    # (2H, 3H)
    wih = jnp.zeros((2 * Hp, 3 * Hp), f32)
    for half in range(2):                             # 0: input_in feats, 1: input_out
        for g in range(3):                            # r, i, n gates
            wih = wih.at[half * Hp:half * Hp + H, g * Hp:g * Hp + H].set(
                wih_t[half * H:(half + 1) * H, g * H:(g + 1) * H])

    bih = jnp.zeros((1, 3 * Hp), f32)
    for g in range(3):
        bih = bih.at[0, g * Hp:g * Hp + H].set(b_ih[g * H:(g + 1) * H])

    biah = jnp.zeros((1, Hp), f32).at[0, :H].set(params["b_iah"].astype(f32))
    boah = jnp.zeros((1, Hp), f32).at[0, :H].set(params["b_oah"].astype(f32))

    return dict(wf=wf.astype(mm_dtype), bf=bf, biah=biah, boah=boah,
                wih=wih.astype(mm_dtype), bih=bih)


# --------------------------------------------------------------------------- #
# Wrapper
# --------------------------------------------------------------------------- #
def gnn_forward(A, hidden, params, step=1, *, batch_block=None,
                matmul_dtype=jnp.bfloat16, vmem_limit_bytes=None,
                min_batch_blocks=2):
    """Equivalent of GNN.forward(A, hidden); the whole `step` recurrence runs
    inside one pallas_call (A / hidden stay resident in VMEM across steps)."""
    A = jnp.asarray(A)
    hidden = jnp.asarray(hidden)
    B, N, H = hidden.shape
    Hp = _round_up(max(H, 128), 128)        # lane-dense feature width
    Np = _round_up(N, 8)                    # sublane-aligned node count

    A_in = A[:, :, :N]
    A_out = A[:, :, N:2 * N]
    if Np != N:                             # padded nodes never touch real nodes (A rows/cols = 0)
        A_in = jnp.pad(A_in, ((0, 0), (0, Np - N), (0, Np - N)))
        A_out = jnp.pad(A_out, ((0, 0), (0, Np - N), (0, Np - N)))
        hidden = jnp.pad(hidden, ((0, 0), (0, Np - N), (0, 0)))
    if Hp != H:                             # padded feature columns stay exactly zero
        hidden = jnp.pad(hidden, ((0, 0), (0, 0), (0, Hp - H)))
    A_in = A_in.astype(matmul_dtype)
    A_out = A_out.astype(matmul_dtype)
    hidden = hidden.astype(jnp.float32)

    ops = _fuse_params(params, H, Hp, matmul_dtype)

    if vmem_limit_bytes is None:
        vmem_limit_bytes = _default_vmem_limit_bytes()
    if batch_block is None:
        TB = _choose_batch_block(B, Np, Hp, matmul_dtype,
                                 int(0.8 * vmem_limit_bytes), min_batch_blocks)
    else:
        TB = int(batch_block)
    TB = max(1, min(TB, B))
    nblk = _cdiv(B, TB)
    Bp = nblk * TB
    if Bp != B:                             # pad batch; padded rows discarded below
        pad = Bp - B
        A_in = jnp.pad(A_in, ((0, pad), (0, 0), (0, 0)))
        A_out = jnp.pad(A_out, ((0, pad), (0, 0), (0, 0)))
        hidden = jnp.pad(hidden, ((0, pad), (0, 0), (0, 0)))

    per_b = lambda i: (i, 0, 0)
    full2 = lambda i: (0, 0)

    kernel = functools.partial(_gnn_kernel, step=int(step),
                               adj_on_vpu=bool(Np <= 32))

    out = pl.pallas_call(
        kernel,
        out_shape=jax.ShapeDtypeStruct((Bp, Np, Hp), jnp.float32),
        grid_spec=pltpu.PrefetchScalarGridSpec(
            num_scalar_prefetch=0,
            grid=(nblk,),
            in_specs=[
                pl.BlockSpec((TB, Np, Np), per_b),        # A_in
                pl.BlockSpec((TB, Np, Np), per_b),        # A_out
                pl.BlockSpec((TB, Np, Hp), per_b),        # hidden
                pl.BlockSpec((Hp, 5 * Hp), full2),        # fused hidden-side weight
                pl.BlockSpec((1, 5 * Hp), full2),         # fused hidden-side bias
                pl.BlockSpec((1, Hp), full2),             # b_iah
                pl.BlockSpec((1, Hp), full2),             # b_oah
                pl.BlockSpec((2 * Hp, 3 * Hp), full2),    # w_ih^T (128-aligned gates)
                pl.BlockSpec((1, 3 * Hp), full2),         # b_ih
            ],
            out_specs=pl.BlockSpec((TB, Np, Hp), per_b),
        ),
        compiler_params=pltpu.CompilerParams(
            dimension_semantics=("parallel",),
            vmem_limit_bytes=int(vmem_limit_bytes)),
    )(A_in, A_out, hidden, ops["wf"], ops["bf"], ops["biah"], ops["boah"],
      ops["wih"], ops["bih"])

    return out[:B, :N, :H]


# --------------------------------------------------------------------------- #
# Parameters / reference
# --------------------------------------------------------------------------- #
def init_params(key, hidden_size):
    """Deterministic synthetic parameters with the shapes from GNN.__init__."""
    H = hidden_size
    ks = jax.random.split(key, 10)
    u = lambda k, shape: jax.random.uniform(k, shape, jnp.float32, -0.1, 0.1)
    return {
        "w_ih": u(ks[0], (3 * H, 2 * H)),
        "w_hh": u(ks[1], (3 * H, H)),
        "b_ih": u(ks[2], (3 * H,)),
        "b_hh": u(ks[3], (3 * H,)),
        "b_iah": u(ks[4], (H,)),
        "b_oah": u(ks[5], (H,)),
        "w_edge_in": u(ks[6], (H, H)),
        "b_edge_in": u(ks[7], (H,)),
        "w_edge_out": u(ks[8], (H, H)),
        "b_edge_out": u(ks[9], (H,)),
        # linear_edge_f exists in __init__ but is unused in forward — omitted.
    }


def gnn_reference(A, hidden, p, step=1):
    """Pure-JAX reference mirroring the PyTorch forward exactly."""
    N = A.shape[1]
    H = hidden.shape[-1]
    for _ in range(step):
        edge_in = hidden @ p["w_edge_in"].T + p["b_edge_in"]
        edge_out = hidden @ p["w_edge_out"].T + p["b_edge_out"]
        input_in = jnp.matmul(A[:, :, :N], edge_in) + p["b_iah"]
        input_out = jnp.matmul(A[:, :, N:2 * N], edge_out) + p["b_oah"]
        inputs = jnp.concatenate([input_in, input_out], axis=2)
        gi = inputs @ p["w_ih"].T + p["b_ih"]
        gh = hidden @ p["w_hh"].T + p["b_hh"]
        i_r, i_i, i_n = gi[..., :H], gi[..., H:2 * H], gi[..., 2 * H:]
        h_r, h_i, h_n = gh[..., :H], gh[..., H:2 * H], gh[..., 2 * H:]
        resetgate = jax.nn.sigmoid(i_r + h_r)
        inputgate = jax.nn.sigmoid(i_i + h_i)
        newgate = jnp.tanh(i_n + resetgate * h_n)
        hidden = newgate + inputgate * (hidden - newgate)
    return hidden


if __name__ == "__main__":
    B, N, H = 2, 8, 32

    key = jax.random.PRNGKey(0)
    k_a, k_h, k_p = jax.random.split(key, 3)

    # Synthetic adjacency (row-normalized, like SR-GNN preprocessing) and hidden states.
    A_raw = jax.random.uniform(k_a, (B, N, 2 * N), jnp.float32)
    A = A_raw / (jnp.sum(A_raw, axis=1, keepdims=True) + 1e-6)
    hidden = jax.random.normal(k_h, (B, N, H), jnp.float32)

    params = init_params(k_p, H)

    # step=1 (module default), f32 matmul path — tight check.
    out1 = jax.block_until_ready(
        gnn_forward(A, hidden, params, step=1, matmul_dtype=jnp.float32))
    ref1 = gnn_reference(A, hidden, params, step=1)
    assert out1.shape == (B, N, H)
    assert jnp.allclose(out1, ref1, atol=1e-4, rtol=1e-4), "step=1 f32 mismatch"

    # step=2: the whole multi-step recurrence stays inside one pallas_call
    # (A and hidden resident in VMEM across steps).
    out2 = jax.block_until_ready(
        gnn_forward(A, hidden, params, step=2, matmul_dtype=jnp.float32))
    ref2 = gnn_reference(A, hidden, params, step=2)
    assert jnp.allclose(out2, ref2, atol=2e-4, rtol=2e-4), "step=2 f32 mismatch"

    # Default bf16 MXU/HBM path (f32 accumulation + f32 GRU epilogue) — loose tol.
    out_bf = jax.block_until_ready(gnn_forward(A, hidden, params, step=1))
    assert jnp.allclose(out_bf, ref1, atol=1e-1, rtol=5e-2), "bf16 matmul mismatch"

    print("KERNEL_OK")
</pallas_src>

<mosaic_0001>
module attributes {stable_mosaic.version = 11 : i64} {
  func.func @_gnn_kernel(%arg0: i32, %arg1: memref<1x8x8xf32, #tpu.memory_space<vmem>>, %arg2: memref<1x8x8xf32, #tpu.memory_space<vmem>>, %arg3: memref<1x8x128xf32, #tpu.memory_space<vmem>>, %arg4: memref<128x640xf32, #tpu.memory_space<vmem>>, %arg5: memref<1x640xf32, #tpu.memory_space<vmem>>, %arg6: memref<1x128xf32, #tpu.memory_space<vmem>>, %arg7: memref<1x128xf32, #tpu.memory_space<vmem>>, %arg8: memref<256x384xf32, #tpu.memory_space<vmem>>, %arg9: memref<1x384xf32, #tpu.memory_space<vmem>>, %arg10: memref<1x8x128xf32, #tpu.memory_space<vmem>>) attributes {dimension_semantics = [#tpu.dimension_semantics<parallel>], iteration_bounds = array<i64: 2>, scalar_prefetch = 0 : i64, scratch_operands = 0 : i64, tpu.core_type = #tpu.core_type<tc>, window_params = [{transform_indices = @transform_0, window_bounds = array<i64: 1, 8, 8>}, {transform_indices = @transform_1, window_bounds = array<i64: 1, 8, 8>}, {transform_indices = @transform_2, window_bounds = array<i64: 1, 8, 128>}, {pipeline_mode = #tpu.pipeline_mode<synchronous>, transform_indices = @transform_3, window_bounds = array<i64: 128, 640>}, {pipeline_mode = #tpu.pipeline_mode<synchronous>, transform_indices = @transform_4, window_bounds = array<i64: 1, 640>}, {pipeline_mode = #tpu.pipeline_mode<synchronous>, transform_indices = @transform_5, window_bounds = array<i64: 1, 128>}, {pipeline_mode = #tpu.pipeline_mode<synchronous>, transform_indices = @transform_6, window_bounds = array<i64: 1, 128>}, {pipeline_mode = #tpu.pipeline_mode<synchronous>, transform_indices = @transform_7, window_bounds = array<i64: 256, 384>}, {pipeline_mode = #tpu.pipeline_mode<synchronous>, transform_indices = @transform_8, window_bounds = array<i64: 1, 384>}, {transform_indices = @transform_9, window_bounds = array<i64: 1, 8, 128>}]} {
    %c0 = arith.constant 0 : index
    %c0_0 = arith.constant 0 : index
    %c0_1 = arith.constant 0 : index
    %0 = vector.load %arg1[%c0, %c0_0, %c0_1] : memref<1x8x8xf32, #tpu.memory_space<vmem>>, vector<1x8x8xf32>
    %c0_2 = arith.constant 0 : index
    %c0_3 = arith.constant 0 : index
    %c0_4 = arith.constant 0 : index
    %1 = vector.load %arg2[%c0_2, %c0_3, %c0_4] : memref<1x8x8xf32, #tpu.memory_space<vmem>>, vector<1x8x8xf32>
    %c0_5 = arith.constant 0 : index
    %c0_6 = arith.constant 0 : index
    %2 = vector.load %arg4[%c0_5, %c0_6] : memref<128x640xf32, #tpu.memory_space<vmem>>, vector<128x640xf32>
    %c0_7 = arith.constant 0 : index
    %c0_8 = arith.constant 0 : index
    %3 = vector.load %arg5[%c0_7, %c0_8] : memref<1x640xf32, #tpu.memory_space<vmem>>, vector<1x640xf32>
    %c0_9 = arith.constant 0 : index
    %c0_10 = arith.constant 0 : index
    %4 = vector.load %arg8[%c0_9, %c0_10] : memref<256x384xf32, #tpu.memory_space<vmem>>, vector<256x384xf32>
    %c0_11 = arith.constant 0 : index
    %c0_12 = arith.constant 0 : index
    %5 = vector.load %arg9[%c0_11, %c0_12] : memref<1x384xf32, #tpu.memory_space<vmem>>, vector<1x384xf32>
    %c0_13 = arith.constant 0 : index
    %c0_14 = arith.constant 0 : index
    %6 = vector.load %arg6[%c0_13, %c0_14] : memref<1x128xf32, #tpu.memory_space<vmem>>, vector<1x128xf32>
    %7 = vector.shape_cast %6 : vector<1x128xf32> to vector<1x1x128xf32>
    %8 = vector.shape_cast %7 : vector<1x1x128xf32> to vector<1x1x128xf32>
    %9 = vector.broadcast %8 : vector<1x1x128xf32> to vector<1x8x128xf32>
    %c0_15 = arith.constant 0 : index
    %c0_16 = arith.constant 0 : index
    %10 = vector.load %arg7[%c0_15, %c0_16] : memref<1x128xf32, #tpu.memory_space<vmem>>, vector<1x128xf32>
    %11 = vector.shape_cast %10 : vector<1x128xf32> to vector<1x1x128xf32>
    %12 = vector.shape_cast %11 : vector<1x1x128xf32> to vector<1x1x128xf32>
    %13 = vector.broadcast %12 : vector<1x1x128xf32> to vector<1x8x128xf32>
    %14 = vector.extract_strided_slice %0 {offsets = [0, 0, 0], sizes = [1, 8, 1], strides = [1, 1, 1]} : vector<1x8x8xf32> to vector<1x8x1xf32>
    %15 = vector.extract_strided_slice %0 {offsets = [0, 0, 1], sizes = [1, 8, 1], strides = [1, 1, 1]} : vector<1x8x8xf32> to vector<1x8x1xf32>
    %16 = vector.extract_strided_slice %0 {offsets = [0, 0, 2], sizes = [1, 8, 1], strides = [1, 1, 1]} : vector<1x8x8xf32> to vector<1x8x1xf32>
    %17 = vector.extract_strided_slice %0 {offsets = [0, 0, 3], sizes = [1, 8, 1], strides = [1, 1, 1]} : vector<1x8x8xf32> to vector<1x8x1xf32>
    %18 = vector.extract_strided_slice %0 {offsets = [0, 0, 4], sizes = [1, 8, 1], strides = [1, 1, 1]} : vector<1x8x8xf32> to vector<1x8x1xf32>
    %19 = vector.extract_strided_slice %0 {offsets = [0, 0, 5], sizes = [1, 8, 1], strides = [1, 1, 1]} : vector<1x8x8xf32> to vector<1x8x1xf32>
    %20 = vector.extract_strided_slice %0 {offsets = [0, 0, 6], sizes = [1, 8, 1], strides = [1, 1, 1]} : vector<1x8x8xf32> to vector<1x8x1xf32>
    %21 = vector.extract_strided_slice %0 {offsets = [0, 0, 7], sizes = [1, 8, 1], strides = [1, 1, 1]} : vector<1x8x8xf32> to vector<1x8x1xf32>
    %22 = vector.extract_strided_slice %1 {offsets = [0, 0, 0], sizes = [1, 8, 1], strides = [1, 1, 1]} : vector<1x8x8xf32> to vector<1x8x1xf32>
    %23 = vector.extract_strided_slice %1 {offsets = [0, 0, 1], sizes = [1, 8, 1], strides = [1, 1, 1]} : vector<1x8x8xf32> to vector<1x8x1xf32>
    %24 = vector.extract_strided_slice %1 {offsets = [0, 0, 2], sizes = [1, 8, 1], strides = [1, 1, 1]} : vector<1x8x8xf32> to vector<1x8x1xf32>
    %25 = vector.extract_strided_slice %1 {offsets = [0, 0, 3], sizes = [1, 8, 1], strides = [1, 1, 1]} : vector<1x8x8xf32> to vector<1x8x1xf32>
    %26 = vector.extract_strided_slice %1 {offsets = [0, 0, 4], sizes = [1, 8, 1], strides = [1, 1, 1]} : vector<1x8x8xf32> to vector<1x8x1xf32>
    %27 = vector.extract_strided_slice %1 {offsets = [0, 0, 5], sizes = [1, 8, 1], strides = [1, 1, 1]} : vector<1x8x8xf32> to vector<1x8x1xf32>
    %28 = vector.extract_strided_slice %1 {offsets = [0, 0, 6], sizes = [1, 8, 1], strides = [1, 1, 1]} : vector<1x8x8xf32> to vector<1x8x1xf32>
    %29 = vector.extract_strided_slice %1 {offsets = [0, 0, 7], sizes = [1, 8, 1], strides = [1, 1, 1]} : vector<1x8x8xf32> to vector<1x8x1xf32>
    %c0_17 = arith.constant 0 : index
    %c0_18 = arith.constant 0 : index
    %c0_19 = arith.constant 0 : index
    %30 = vector.load %arg3[%c0_17, %c0_18, %c0_19] : memref<1x8x128xf32, #tpu.memory_space<vmem>>, vector<1x8x128xf32>
    %31 = vector.shape_cast %30 : vector<1x8x128xf32> to vector<8x128xf32>
    %cst = arith.constant dense<0.000000e+00> : vector<8x640xf32>
    %32 = tpu.matmul %31, %2, %cst {dimension_numbers = #tpu.dot_dimension_numbers<[1], [0], [0], [1], [0, 0, 1, 1], [], []>} : vector<8x128xf32>, vector<128x640xf32>, vector<8x640xf32> -> vector<8x640xf32>
    %33 = vector.broadcast %3 : vector<1x640xf32> to vector<8x640xf32>
    %34 = arith.addf %32, %33 : vector<8x640xf32>
    %35 = vector.extract_strided_slice %34 {offsets = [0, 0], sizes = [8, 128], strides = [1, 1]} : vector<8x640xf32> to vector<8x128xf32>
    %36 = vector.shape_cast %35 : vector<8x128xf32> to vector<1x8x128xf32>
    %37 = vector.extract_strided_slice %34 {offsets = [0, 128], sizes = [8, 128], strides = [1, 1]} : vector<8x640xf32> to vector<8x128xf32>
    %38 = vector.shape_cast %37 : vector<8x128xf32> to vector<1x8x128xf32>
    %39 = vector.extract_strided_slice %34 {offsets = [0, 256], sizes = [8, 384], strides = [1, 1]} : vector<8x640xf32> to vector<8x384xf32>
    %40 = vector.extract_strided_slice %36 {offsets = [0, 0, 0], sizes = [1, 1, 128], strides = [1, 1, 1]} : vector<1x8x128xf32> to vector<1x1x128xf32>
    %41 = vector.broadcast %14 : vector<1x8x1xf32> to vector<1x8x128xf32>
    %42 = vector.broadcast %40 : vector<1x1x128xf32> to vector<1x8x128xf32>
    %43 = arith.mulf %41, %42 : vector<1x8x128xf32>
    %44 = arith.addf %9, %43 : vector<1x8x128xf32>
    %45 = vector.extract_strided_slice %38 {offsets = [0, 0, 0], sizes = [1, 1, 128], strides = [1, 1, 1]} : vector<1x8x128xf32> to vector<1x1x128xf32>
    %46 = vector.broadcast %22 : vector<1x8x1xf32> to vector<1x8x128xf32>
    %47 = vector.broadcast %45 : vector<1x1x128xf32> to vector<1x8x128xf32>
    %48 = arith.mulf %46, %47 : vector<1x8x128xf32>
    %49 = arith.addf %13, %48 : vector<1x8x128xf32>
    %50 = vector.extract_strided_slice %36 {offsets = [0, 1, 0], sizes = [1, 1, 128], strides = [1, 1, 1]} : vector<1x8x128xf32> to vector<1x1x128xf32>
    %51 = vector.broadcast %15 : vector<1x8x1xf32> to vector<1x8x128xf32>
    %52 = vector.broadcast %50 : vector<1x1x128xf32> to vector<1x8x128xf32>
    %53 = arith.mulf %51, %52 : vector<1x8x128xf32>
    %54 = arith.addf %44, %53 : vector<1x8x128xf32>
    %55 = vector.extract_strided_slice %38 {offsets = [0, 1, 0], sizes = [1, 1, 128], strides = [1, 1, 1]} : vector<1x8x128xf32> to vector<1x1x128xf32>
    %56 = vector.broadcast %23 : vector<1x8x1xf32> to vector<1x8x128xf32>
    %57 = vector.broadcast %55 : vector<1x1x128xf32> to vector<1x8x128xf32>
    %58 = arith.mulf %56, %57 : vector<1x8x128xf32>
    %59 = arith.addf %49, %58 : vector<1x8x128xf32>
    %60 = vector.extract_strided_slice %36 {offsets = [0, 2, 0], sizes = [1, 1, 128], strides = [1, 1, 1]} : vector<1x8x128xf32> to vector<1x1x128xf32>
    %61 = vector.broadcast %16 : vector<1x8x1xf32> to vector<1x8x128xf32>
    %62 = vector.broadcast %60 : vector<1x1x128xf32> to vector<1x8x128xf32>
    %63 = arith.mulf %61, %62 : vector<1x8x128xf32>
    %64 = arith.addf %54, %63 : vector<1x8x128xf32>
    %65 = vector.extract_strided_slice %38 {offsets = [0, 2, 0], sizes = [1, 1, 128], strides = [1, 1, 1]} : vector<1x8x128xf32> to vector<1x1x128xf32>
    %66 = vector.broadcast %24 : vector<1x8x1xf32> to vector<1x8x128xf32>
    %67 = vector.broadcast %65 : vector<1x1x128xf32> to vector<1x8x128xf32>
    %68 = arith.mulf %66, %67 : vector<1x8x128xf32>
    %69 = arith.addf %59, %68 : vector<1x8x128xf32>
    %70 = vector.extract_strided_slice %36 {offsets = [0, 3, 0], sizes = [1, 1, 128], strides = [1, 1, 1]} : vector<1x8x128xf32> to vector<1x1x128xf32>
    %71 = vector.broadcast %17 : vector<1x8x1xf32> to vector<1x8x128xf32>
    %72 = vector.broadcast %70 : vector<1x1x128xf32> to vector<1x8x128xf32>
    %73 = arith.mulf %71, %72 : vector<1x8x128xf32>
    %74 = arith.addf %64, %73 : vector<1x8x128xf32>
    %75 = vector.extract_strided_slice %38 {offsets = [0, 3, 0], sizes = [1, 1, 128], strides = [1, 1, 1]} : vector<1x8x128xf32> to vector<1x1x128xf32>
    %76 = vector.broadcast %25 : vector<1x8x1xf32> to vector<1x8x128xf32>
    %77 = vector.broadcast %75 : vector<1x1x128xf32> to vector<1x8x128xf32>
    %78 = arith.mulf %76, %77 : vector<1x8x128xf32>
    %79 = arith.addf %69, %78 : vector<1x8x128xf32>
    %80 = vector.extract_strided_slice %36 {offsets = [0, 4, 0], sizes = [1, 1, 128], strides = [1, 1, 1]} : vector<1x8x128xf32> to vector<1x1x128xf32>
    %81 = vector.broadcast %18 : vector<1x8x1xf32> to vector<1x8x128xf32>
    %82 = vector.broadcast %80 : vector<1x1x128xf32> to vector<1x8x128xf32>
    %83 = arith.mulf %81, %82 : vector<1x8x128xf32>
    %84 = arith.addf %74, %83 : vector<1x8x128xf32>
    %85 = vector.extract_strided_slice %38 {offsets = [0, 4, 0], sizes = [1, 1, 128], strides = [1, 1, 1]} : vector<1x8x128xf32> to vector<1x1x128xf32>
    %86 = vector.broadcast %26 : vector<1x8x1xf32> to vector<1x8x128xf32>
    %87 = vector.broadcast %85 : vector<1x1x128xf32> to vector<1x8x128xf32>
    %88 = arith.mulf %86, %87 : vector<1x8x128xf32>
    %89 = arith.addf %79, %88 : vector<1x8x128xf32>
    %90 = vector.extract_strided_slice %36 {offsets = [0, 5, 0], sizes = [1, 1, 128], strides = [1, 1, 1]} : vector<1x8x128xf32> to vector<1x1x128xf32>
    %91 = vector.broadcast %19 : vector<1x8x1xf32> to vector<1x8x128xf32>
    %92 = vector.broadcast %90 : vector<1x1x128xf32> to vector<1x8x128xf32>
    %93 = arith.mulf %91, %92 : vector<1x8x128xf32>
    %94 = arith.addf %84, %93 : vector<1x8x128xf32>
    %95 = vector.extract_strided_slice %38 {offsets = [0, 5, 0], sizes = [1, 1, 128], strides = [1, 1, 1]} : vector<1x8x128xf32> to vector<1x1x128xf32>
    %96 = vector.broadcast %27 : vector<1x8x1xf32> to vector<1x8x128xf32>
    %97 = vector.broadcast %95 : vector<1x1x128xf32> to vector<1x8x128xf32>
    %98 = arith.mulf %96, %97 : vector<1x8x128xf32>
    %99 = arith.addf %89, %98 : vector<1x8x128xf32>
    %100 = vector.extract_strided_slice %36 {offsets = [0, 6, 0], sizes = [1, 1, 128], strides = [1, 1, 1]} : vector<1x8x128xf32> to vector<1x1x128xf32>
    %101 = vector.broadcast %20 : vector<1x8x1xf32> to vector<1x8x128xf32>
    %102 = vector.broadcast %100 : vector<1x1x128xf32> to vector<1x8x128xf32>
    %103 = arith.mulf %101, %102 : vector<1x8x128xf32>
    %104 = arith.addf %94, %103 : vector<1x8x128xf32>
    %105 = vector.extract_strided_slice %38 {offsets = [0, 6, 0], sizes = [1, 1, 128], strides = [1, 1, 1]} : vector<1x8x128xf32> to vector<1x1x128xf32>
    %106 = vector.broadcast %28 : vector<1x8x1xf32> to vector<1x8x128xf32>
    %107 = vector.broadcast %105 : vector<1x1x128xf32> to vector<1x8x128xf32>
    %108 = arith.mulf %106, %107 : vector<1x8x128xf32>
    %109 = arith.addf %99, %108 : vector<1x8x128xf32>
    %110 = vector.extract_strided_slice %36 {offsets = [0, 7, 0], sizes = [1, 1, 128], strides = [1, 1, 1]} : vector<1x8x128xf32> to vector<1x1x128xf32>
    %111 = vector.broadcast %21 : vector<1x8x1xf32> to vector<1x8x128xf32>
    %112 = vector.broadcast %110 : vector<1x1x128xf32> to vector<1x8x128xf32>
    %113 = arith.mulf %111, %112 : vector<1x8x128xf32>
    %114 = arith.addf %104, %113 : vector<1x8x128xf32>
    %115 = vector.extract_strided_slice %38 {offsets = [0, 7, 0], sizes = [1, 1, 128], strides = [1, 1, 1]} : vector<1x8x128xf32> to vector<1x1x128xf32>
    %116 = vector.broadcast %29 : vector<1x8x1xf32> to vector<1x8x128xf32>
    %117 = vector.broadcast %115 : vector<1x1x128xf32> to vector<1x8x128xf32>
    %118 = arith.mulf %116, %117 : vector<1x8x128xf32>
    %119 = arith.addf %109, %118 : vector<1x8x128xf32>
    %120 = tpu.concatenate %114, %119 in 2 : vector<1x8x128xf32>, vector<1x8x128xf32> -> vector<1x8x256xf32>
    %121 = vector.shape_cast %120 : vector<1x8x256xf32> to vector<8x256xf32>
    %cst_20 = arith.constant dense<0.000000e+00> : vector<8x384xf32>
    %122 = tpu.matmul %121, %4, %cst_20 {dimension_numbers = #tpu.dot_dimension_numbers<[1], [0], [0], [1], [0, 0, 1, 1], [], []>} : vector<8x256xf32>, vector<256x384xf32>, vector<8x384xf32> -> vector<8x384xf32>
    %123 = vector.broadcast %5 : vector<1x384xf32> to vector<8x384xf32>
    %124 = arith.addf %122, %123 : vector<8x384xf32>
    %125 = vector.extract_strided_slice %124 {offsets = [0, 0], sizes = [8, 128], strides = [1, 1]} : vector<8x384xf32> to vector<8x128xf32>
    %126 = vector.extract_strided_slice %124 {offsets = [0, 128], sizes = [8, 128], strides = [1, 1]} : vector<8x384xf32> to vector<8x128xf32>
    %127 = vector.extract_strided_slice %124 {offsets = [0, 256], sizes = [8, 128], strides = [1, 1]} : vector<8x384xf32> to vector<8x128xf32>
    %128 = vector.extract_strided_slice %39 {offsets = [0, 0], sizes = [8, 128], strides = [1, 1]} : vector<8x384xf32> to vector<8x128xf32>
    %129 = vector.extract_strided_slice %39 {offsets = [0, 128], sizes = [8, 128], strides = [1, 1]} : vector<8x384xf32> to vector<8x128xf32>
    %130 = vector.extract_strided_slice %39 {offsets = [0, 256], sizes = [8, 128], strides = [1, 1]} : vector<8x384xf32> to vector<8x128xf32>
    %131 = arith.addf %125, %128 : vector<8x128xf32>
    %132 = arith.negf %131 : vector<8x128xf32>
    %133 = math.exp %132 : vector<8x128xf32>
    %cst_21 = arith.constant 1.000000e+00 : f32
    %134 = vector.broadcast %cst_21 : f32 to vector<8x128xf32>
    %135 = arith.addf %134, %133 : vector<8x128xf32>
    %136 = arith.divf %134, %135 : vector<8x128xf32>
    %137 = arith.addf %126, %129 : vector<8x128xf32>
    %138 = arith.negf %137 : vector<8x128xf32>
    %139 = math.exp %138 : vector<8x128xf32>
    %cst_22 = arith.constant 1.000000e+00 : f32
    %140 = vector.broadcast %cst_22 : f32 to vector<8x128xf32>
    %141 = arith.addf %140, %139 : vector<8x128xf32>
    %142 = arith.divf %140, %141 : vector<8x128xf32>
    %143 = arith.mulf %136, %130 : vector<8x128xf32>
    %144 = arith.addf %127, %143 : vector<8x128xf32>
    %145 = math.tanh %144 : vector<8x128xf32>
    %146 = arith.subf %31, %145 : vector<8x128xf32>
    %147 = arith.mulf %142, %146 : vector<8x128xf32>
    %148 = arith.addf %145, %147 : vector<8x128xf32>
    %149 = vector.shape_cast %148 : vector<8x128xf32> to vector<1x8x128xf32>
    %c0_23 = arith.constant 0 : index
    %c0_24 = arith.constant 0 : index
    %c0_25 = arith.constant 0 : index
    %150 = vector.load %arg10[%c0_23, %c0_24, %c0_25] : memref<1x8x128xf32, #tpu.memory_space<vmem>>, vector<1x8x128xf32>
    tpu.vector_store %arg10[%c0_23, %c0_24, %c0_25], %149 {strides = array<i32>} : memref<1x8x128xf32, #tpu.memory_space<vmem>>, vector<1x8x128xf32>,
    return
  }
  func.func @transform_0(%arg0: i32) -> (i32, i32, i32) {
    %c0_i32 = arith.constant 0 : i32
    %c0_i32_0 = arith.constant 0 : i32
    %c0_i32_1 = arith.constant 0 : i32
    return %arg0, %c0_i32, %c0_i32_0 : i32, i32, i32
  }
  func.func @transform_1(%arg0: i32) -> (i32, i32, i32) {
    %c0_i32 = arith.constant 0 : i32
    %c0_i32_0 = arith.constant 0 : i32
    %c0_i32_1 = arith.constant 0 : i32
    return %arg0, %c0_i32, %c0_i32_0 : i32, i32, i32
  }
  func.func @transform_2(%arg0: i32) -> (i32, i32, i32) {
    %c0_i32 = arith.constant 0 : i32
    %c0_i32_0 = arith.constant 0 : i32
    %c0_i32_1 = arith.constant 0 : i32
    return %arg0, %c0_i32, %c0_i32_0 : i32, i32, i32
  }
  func.func @transform_3(%arg0: i32) -> (i32, i32) {
    %c0_i32 = arith.constant 0 : i32
    %c0_i32_0 = arith.constant 0 : i32
    %c0_i32_1 = arith.constant 0 : i32
    return %c0_i32, %c0_i32_0 : i32, i32
  }
  func.func @transform_4(%arg0: i32) -> (i32, i32) {
    %c0_i32 = arith.constant 0 : i32
    %c0_i32_0 = arith.constant 0 : i32
    %c0_i32_1 = arith.constant 0 : i32
    return %c0_i32, %c0_i32_0 : i32, i32
  }
  func.func @transform_5(%arg0: i32) -> (i32, i32) {
    %c0_i32 = arith.constant 0 : i32
    %c0_i32_0 = arith.constant 0 : i32
    %c0_i32_1 = arith.constant 0 : i32
    return %c0_i32, %c0_i32_0 : i32, i32
  }
  func.func @transform_6(%arg0: i32) -> (i32, i32) {
    %c0_i32 = arith.constant 0 : i32
    %c0_i32_0 = arith.constant 0 : i32
    %c0_i32_1 = arith.constant 0 : i32
    return %c0_i32, %c0_i32_0 : i32, i32
  }
  func.func @transform_7(%arg0: i32) -> (i32, i32) {
    %c0_i32 = arith.constant 0 : i32
    %c0_i32_0 = arith.constant 0 : i32
    %c0_i32_1 = arith.constant 0 : i32
    return %c0_i32, %c0_i32_0 : i32, i32
  }
  func.func @transform_8(%arg0: i32) -> (i32, i32) {
    %c0_i32 = arith.constant 0 : i32
    %c0_i32_0 = arith.constant 0 : i32
    %c0_i32_1 = arith.constant 0 : i32
    return %c0_i32, %c0_i32_0 : i32, i32
  }
  func.func @transform_9(%arg0: i32) -> (i32, i32, i32) {
    %c0_i32 = arith.constant 0 : i32
    %c0_i32_0 = arith.constant 0 : i32
    %c0_i32_1 = arith.constant 0 : i32
    return %arg0, %c0_i32, %c0_i32_0 : i32, i32, i32
  }
}

</mosaic_0001>

<llo_original>
// kernel: tpu_custom_call.1
$region0: #{tpu_custom_call.1}
  #allocation0 [shape = 'u32[]', space=smem, size = 0x4, offset = 0x4, fixed_abs, tag = 'smem constant byte address 0x4 - core index']
  #allocation1 [shape = 'u32[144,128]{1,0:T(1,128)}', space=vmem, size = 0x12000, scoped, tag = 'internal scratch']
  %s0 = inlined_call_operand.hbm [shape: f32[2,8,8], index: 0, kind: input, shape index: {}]
  %s1 = inlined_call_operand.hbm [shape: f32[2,8,8], index: 1, kind: input, shape index: {}]
  %s2 = inlined_call_operand.hbm [shape: f32[2,8,128], index: 2, kind: input, shape index: {}]
  %s3 = inlined_call_operand.hbm [shape: f32[128,640], index: 3, kind: input, shape index: {}]
  %s4 = inlined_call_operand.vmem [shape: f32[1,640], index: 4, kind: input, shape index: {}]
  %s5 = inlined_call_operand.vmem [shape: f32[1,128], index: 5, kind: input, shape index: {}]
  %s6 = inlined_call_operand.vmem [shape: f32[1,128], index: 6, kind: input, shape index: {}]
  %s7 = inlined_call_operand.hbm [shape: f32[256,384], index: 7, kind: input, shape index: {}]
  %s8 = inlined_call_operand.vmem [shape: f32[1,384], index: 8, kind: input, shape index: {}]
  %s9 = inlined_call_operand.hbm [shape: f32[2,8,128], index: 9, kind: output, shape index: {}]
  %s10 = sld [smem:[#allocation0]]
  $region89: #{tpu_custom_call.1} parent=0
    _
  %s12 = ssub.s32 1, %s10
  %s13 = scalar_select 0, %s12, %s10
  $region1: #{tpu_custom_call.1} parent=0
    #allocation2 [shape = 'u8[8192]{0}', space=vmem, size = 0x2000, scoped, tag = 'input window, operand 0']
    #allocation3 [shape = 's32[2]{0}', space=sflag, size = 0x8, scoped, tag = 'scoped memory for tpu_custom_call.1']
    #allocation4 [shape = 's32[2]{0}', space=sflag, size = 0x8, scoped, tag = 'scoped memory for tpu_custom_call.1']
    #allocation5 [shape = 'u8[8192]{0}', space=vmem, size = 0x2000, scoped, tag = 'input window, operand 1']
    #allocation6 [shape = 's32[2]{0}', space=sflag, size = 0x8, scoped, tag = 'scoped memory for tpu_custom_call.1']
    #allocation7 [shape = 'u8[8192]{0}', space=vmem, size = 0x2000, scoped, tag = 'input window, operand 2']
    #allocation8 [shape = 'u8[327680]{0}', space=vmem, size = 0x50000, scoped, tag = 'input window, operand 3, single buffered']
    #allocation9 [shape = 's32[1]{0}', space=sflag, size = 0x4, scoped, tag = 'scoped memory for tpu_custom_call.1']
    #allocation10 [shape = 'u8[393216]{0}', space=vmem, size = 0x60000, scoped, tag = 'input window, operand 7, single buffered']
    #allocation11 [shape = 'u8[8192]{0}', space=vmem, size = 0x2000, scoped, tag = 'output window, operand 0']
    %14 = vsyncpa [#allocation3], 0
    %s15 = scalar_lea.sflag [#allocation3], 1
    %16 = vsyncpa %s15, 0
    %17 = vsyncpa [#allocation6], 0
    %s18 = scalar_lea.sflag [#allocation6], 1
    %19 = vsyncpa %s18, 0
    %20 = vsyncpa [#allocation9], 0
    %21 = vsyncpa [#allocation4], 0
    %s22 = scalar_lea.sflag [#allocation4], 1
    %23 = vsyncpa %s22, 0
    loop: start=0, step=1, limit=4
    $region2: #{tpu_custom_call.1} parent=1 // loop_pre_header
      _
    $region3: #{tpu_custom_call.1} parent=1 // loop_header
      %s25 = sphi 0, %s29
      %p26 = scmp.ge.s32.totalorder %s25, 4
      %s35 = sphi 0, %s37
      %s38 = sphi 0, %s35
      %s39 = sphi 0, %s38
      %s55 = sphi 0, %s39
      %s61 = sphi 0, %s63
      %s64 = sphi 0, %s61
      %s65 = sphi 0, %s64
      %s81 = sphi 0, %s65
      %s87 = sphi 0, %s89
      %s90 = sphi 0, %s87
      %s91 = sphi 0, %s90
      %s107 = sphi 0, %s91
      %s111 = sphi 0, %s111
      %s113 = sphi 0, %s111
      %s114 = sphi 0, %s113
      %s128 = sphi 0, %s114
      %s132 = sphi 0, %s132
      %s134 = sphi 0, %s132
      %s135 = sphi 0, %s134
      %s149 = sphi 0, %s135
      %s153 = sphi 0, %s153
      %s155 = sphi 0, %s153
      %s156 = sphi 0, %s155
      %s170 = sphi 0, %s156
      %s174 = sphi 0, %s174
      %s176 = sphi 0, %s174
      %s177 = sphi 0, %s176
      %s191 = sphi 0, %s177
      %s195 = sphi 0, %s195
      %s197 = sphi 0, %s195
      %s198 = sphi 0, %s197
      %s212 = sphi 0, %s198
      %s216 = sphi 0, %s216
      %s218 = sphi 0, %s216
      %s219 = sphi 0, %s218
      %s233 = sphi 0, %s219
      %s239 = sphi 0, %s241
      %s242 = sphi 0, %s239
      %s243 = sphi 0, %s242
      %s259 = sphi 0, %s243
    $region4: #{tpu_custom_call.1} parent=1 // loop_header_branch
      %28 = sbr.rel (%p26) target = $region8
    $region5: #{tpu_custom_call.1} parent=1 // loop_body
      %s30 = ssub.s32 %s25, 1
      %s31 = ssub.s32 %s25, 2
      %s32 = sadd.s32 %s25, 1
      %s33 = ssub.s32 %s25, %s32
      %p34 = scmp.eq.s32.totalorder %s33, 0
      %s36 = sadd.s32 %s35, 1
      %s37 = scalar_select %p34, %s35, %s36
      %p40 = pneg %p34
      %p41 = scmp.eq.s32.totalorder %s25, 1
      %p42 = por %p40, %p41
      %p43 = scmp.ne.s32.totalorder %s35, %s38
      %p44 = scmp.eq.s32.totalorder %s25, 0
      %p45 = por %p43, %p44
      %p46 = scmp.ne.s32.totalorder %s35, %s38
      %p47 = scmp.eq.s32.totalorder %s30, 1
      %p48 = por %p46, %p47
      %p49 = scmp.ne.s32.totalorder %s38, %s39
      %p50 = scmp.eq.s32.totalorder %s30, 0
      %p51 = por %p49, %p50
      %p52 = scmp.ne.s32.totalorder %s38, %s39
      %p53 = scmp.eq.s32.totalorder %s31, 1
      %p54 = por %p52, %p53
      %p56 = scmp.ne.s32.totalorder %s39, %s55
      %p57 = scmp.eq.s32.totalorder %s31, 0
      %p58 = por %p56, %p57
      %s59 = ssub.s32 %s25, %s32
      %p60 = scmp.eq.s32.totalorder %s59, 0
      %s62 = sadd.s32 %s61, 1
      %s63 = scalar_select %p60, %s61, %s62
      %p66 = pneg %p60
      %p67 = scmp.eq.s32.totalorder %s25, 1
      %p68 = por %p66, %p67
      %p69 = scmp.ne.s32.totalorder %s61, %s64
      %p70 = scmp.eq.s32.totalorder %s25, 0
      %p71 = por %p69, %p70
      %p72 = scmp.ne.s32.totalorder %s61, %s64
      %p73 = scmp.eq.s32.totalorder %s30, 1
      %p74 = por %p72, %p73
      %p75 = scmp.ne.s32.totalorder %s64, %s65
      %p76 = scmp.eq.s32.totalorder %s30, 0
      %p77 = por %p75, %p76
      %p78 = scmp.ne.s32.totalorder %s64, %s65
      %p79 = scmp.eq.s32.totalorder %s31, 1
      %p80 = por %p78, %p79
      %p82 = scmp.ne.s32.totalorder %s65, %s81
      %p83 = scmp.eq.s32.totalorder %s31, 0
      %p84 = por %p82, %p83
      %s85 = ssub.s32 %s25, %s32
      %p86 = scmp.eq.s32.totalorder %s85, 0
      %s88 = sadd.s32 %s87, 1
      %s89 = scalar_select %p86, %s87, %s88
      %p92 = pneg %p86
      %p93 = scmp.eq.s32.totalorder %s25, 1
      %p94 = por %p92, %p93
      %p95 = scmp.ne.s32.totalorder %s87, %s90
      %p96 = scmp.eq.s32.totalorder %s25, 0
      %p97 = por %p95, %p96
      %p98 = scmp.ne.s32.totalorder %s87, %s90
      %p99 = scmp.eq.s32.totalorder %s30, 1
      %p100 = por %p98, %p99
      %p101 = scmp.ne.s32.totalorder %s90, %s91
      %p102 = scmp.eq.s32.totalorder %s30, 0
      %p103 = por %p101, %p102
      %p104 = scmp.ne.s32.totalorder %s90, %s91
      %p105 = scmp.eq.s32.totalorder %s31, 1
      %p106 = por %p104, %p105
      %p108 = scmp.ne.s32.totalorder %s91, %s107
      %p109 = scmp.eq.s32.totalorder %s31, 0
      %p110 = por %p108, %p109
      %s112 = sadd.s32 %s111, 1
      %p115 = scmp.eq.s32.totalorder %s25, 1
      %p116 = scmp.ne.s32.totalorder %s111, %s113
      %p117 = scmp.eq.s32.totalorder %s25, 0
      %p118 = por %p116, %p117
      %p119 = scmp.ne.s32.totalorder %s111, %s113
      %p120 = scmp.eq.s32.totalorder %s30, 1
      %p121 = por %p119, %p120
      %p122 = scmp.ne.s32.totalorder %s113, %s114
      %p123 = scmp.eq.s32.totalorder %s30, 0
      %p124 = por %p122, %p123
      %p125 = scmp.ne.s32.totalorder %s113, %s114
      %p126 = scmp.eq.s32.totalorder %s31, 1
      %p127 = por %p125, %p126
      %p129 = scmp.ne.s32.totalorder %s114, %s128
      %p130 = scmp.eq.s32.totalorder %s31, 0
      %p131 = por %p129, %p130
      %s133 = sadd.s32 %s132, 1
      %p136 = scmp.eq.s32.totalorder %s25, 1
      %p137 = scmp.ne.s32.totalorder %s132, %s134
      %p138 = scmp.eq.s32.totalorder %s25, 0
      %p139 = por %p137, %p138
      %p140 = scmp.ne.s32.totalorder %s132, %s134
      %p141 = scmp.eq.s32.totalorder %s30, 1
      %p142 = por %p140, %p141
      %p143 = scmp.ne.s32.totalorder %s134, %s135
      %p144 = scmp.eq.s32.totalorder %s30, 0
      %p145 = por %p143, %p144
      %p146 = scmp.ne.s32.totalorder %s134, %s135
      %p147 = scmp.eq.s32.totalorder %s31, 1
      %p148 = por %p146, %p147
      %p150 = scmp.ne.s32.totalorder %s135, %s149
      %p151 = scmp.eq.s32.totalorder %s31, 0
      %p152 = por %p150, %p151
      %s154 = sadd.s32 %s153, 1
      %p157 = scmp.eq.s32.totalorder %s25, 1
      %p158 = scmp.ne.s32.totalorder %s153, %s155
      %p159 = scmp.eq.s32.totalorder %s25, 0
      %p160 = por %p158, %p159
      %p161 = scmp.ne.s32.totalorder %s153, %s155
      %p162 = scmp.eq.s32.totalorder %s30, 1
      %p163 = por %p161, %p162
      %p164 = scmp.ne.s32.totalorder %s155, %s156
      %p165 = scmp.eq.s32.totalorder %s30, 0
      %p166 = por %p164, %p165
      %p167 = scmp.ne.s32.totalorder %s155, %s156
      %p168 = scmp.eq.s32.totalorder %s31, 1
      %p169 = por %p167, %p168
      %p171 = scmp.ne.s32.totalorder %s156, %s170
      %p172 = scmp.eq.s32.totalorder %s31, 0
      %p173 = por %p171, %p172
      %s175 = sadd.s32 %s174, 1
      %p178 = scmp.eq.s32.totalorder %s25, 1
      %p179 = scmp.ne.s32.totalorder %s174, %s176
      %p180 = scmp.eq.s32.totalorder %s25, 0
      %p181 = por %p179, %p180
      %p182 = scmp.ne.s32.totalorder %s174, %s176
      %p183 = scmp.eq.s32.totalorder %s30, 1
      %p184 = por %p182, %p183
      %p185 = scmp.ne.s32.totalorder %s176, %s177
      %p186 = scmp.eq.s32.totalorder %s30, 0
      %p187 = por %p185, %p186
      %p188 = scmp.ne.s32.totalorder %s176, %s177
      %p189 = scmp.eq.s32.totalorder %s31, 1
      %p190 = por %p188, %p189
      %p192 = scmp.ne.s32.totalorder %s177, %s191
      %p193 = scmp.eq.s32.totalorder %s31, 0
      %p194 = por %p192, %p193
      %s196 = sadd.s32 %s195, 1
      %p199 = scmp.eq.s32.totalorder %s25, 1
      %p200 = scmp.ne.s32.totalorder %s195, %s197
      %p201 = scmp.eq.s32.totalorder %s25, 0
      %p202 = por %p200, %p201
      %p203 = scmp.ne.s32.totalorder %s195, %s197
      %p204 = scmp.eq.s32.totalorder %s30, 1
      %p205 = por %p203, %p204
      %p206 = scmp.ne.s32.totalorder %s197, %s198
      %p207 = scmp.eq.s32.totalorder %s30, 0
      %p208 = por %p206, %p207
      %p209 = scmp.ne.s32.totalorder %s197, %s198
      %p210 = scmp.eq.s32.totalorder %s31, 1
      %p211 = por %p209, %p210
      %p213 = scmp.ne.s32.totalorder %s198, %s212
      %p214 = scmp.eq.s32.totalorder %s31, 0
      %p215 = por %p213, %p214
      %s217 = sadd.s32 %s216, 1
      %p220 = scmp.eq.s32.totalorder %s25, 1
      %p221 = scmp.ne.s32.totalorder %s216, %s218
      %p222 = scmp.eq.s32.totalorder %s25, 0
      %p223 = por %p221, %p222
      %p224 = scmp.ne.s32.totalorder %s216, %s218
      %p225 = scmp.eq.s32.totalorder %s30, 1
      %p226 = por %p224, %p225
      %p227 = scmp.ne.s32.totalorder %s218, %s219
      %p228 = scmp.eq.s32.totalorder %s30, 0
      %p229 = por %p227, %p228
      %p230 = scmp.ne.s32.totalorder %s218, %s219
      %p231 = scmp.eq.s32.totalorder %s31, 1
      %p232 = por %p230, %p231
      %p234 = scmp.ne.s32.totalorder %s219, %s233
      %p235 = scmp.eq.s32.totalorder %s31, 0
      %p236 = por %p234, %p235
      %s237 = ssub.s32 %s25, %s32
      %p238 = scmp.eq.s32.totalorder %s237, 0
      %s240 = sadd.s32 %s239, 1
      %s241 = scalar_select %p238, %s239, %s240
      %p244 = pneg %p238
      %p245 = scmp.eq.s32.totalorder %s25, 1
      %p246 = por %p244, %p245
      %p247 = scmp.ne.s32.totalorder %s239, %s242
      %p248 = scmp.eq.s32.totalorder %s25, 0
      %p249 = por %p247, %p248
      %p250 = scmp.ne.s32.totalorder %s239, %s242
      %p251 = scmp.eq.s32.totalorder %s30, 1
      %p252 = por %p250, %p251
      %p253 = scmp.ne.s32.totalorder %s242, %s243
      %p254 = scmp.eq.s32.totalorder %s30, 0
      %p255 = por %p253, %p254
      %p256 = scmp.ne.s32.totalorder %s242, %s243
      %p257 = scmp.eq.s32.totalorder %s31, 1
      %p258 = por %p256, %p257
      %p260 = scmp.ne.s32.totalorder %s243, %s259
      %p261 = scmp.eq.s32.totalorder %s31, 0
      %p262 = por %p260, %p261
      %p263 = scmp.le.s32.totalorder 1, %s25
      %p264 = scmp.lt.s32.totalorder %s25, 3
      %p265 = pnand %p263, %p264
      %p266 = pneg %p265
      // Predicated region
      $region9: #{tpu_custom_call.1} parent=5 // pred_check
        _
      $region10: #{tpu_custom_call.1} parent=5 // pred_check_branch
        %268 = sbr.rel (%p265) target = $region12
      $region11: #{tpu_custom_call.1} parent=5 // pred_region
        %s269 = ssub.s32 %s25, 1
        // Predicated region
        $region13: #{tpu_custom_call.1} parent=11 // pred_check
          %p270 = pneg %p124
        $region14: #{tpu_custom_call.1} parent=11 // pred_check_branch
          %272 = sbr.rel (%p270) target = $region16
        $region15: #{tpu_custom_call.1} parent=11 // pred_region
          %s274 = ssub.s32 10240, 10240
          %275 = vsyncadd [#allocation9], %s274
          %s276 = sshll.u32 [#allocation8], 4
          %s277 = int_to_ptr.vmem [resolvable:$true] %s276
          %282 = dma.hbm_to_vmem [thread:$0]  %s3, 10240, %s277, [#allocation9], 640, 640, 40
        $region16: #{tpu_custom_call.1} parent=11 // pred_fallthru
          _
        // Predicated region
        $region17: #{tpu_custom_call.1} parent=11 // pred_check
          %p283 = pneg %p145
        $region18: #{tpu_custom_call.1} parent=11 // pred_check_branch
          %285 = sbr.rel (%p283) target = $region20
        $region19: #{tpu_custom_call.1} parent=11 // pred_region
          _
        $region20: #{tpu_custom_call.1} parent=11 // pred_fallthru
          _
        // Predicated region
        $region21: #{tpu_custom_call.1} parent=11 // pred_check
          %p286 = pneg %p166
        $region22: #{tpu_custom_call.1} parent=11 // pred_check_branch
          %288 = sbr.rel (%p286) target = $region24
        $region23: #{tpu_custom_call.1} parent=11 // pred_region
          _
        $region24: #{tpu_custom_call.1} parent=11 // pred_fallthru
          _
        // Predicated region
        $region25: #{tpu_custom_call.1} parent=11 // pred_check
          %p289 = pneg %p187
        $region26: #{tpu_custom_call.1} parent=11 // pred_check_branch
          %291 = sbr.rel (%p289) target = $region28
        $region27: #{tpu_custom_call.1} parent=11 // pred_region
          _
        $region28: #{tpu_custom_call.1} parent=11 // pred_fallthru
          _
        // Predicated region
        $region29: #{tpu_custom_call.1} parent=11 // pred_check
          %p292 = pneg %p208
        $region30: #{tpu_custom_call.1} parent=11 // pred_check_branch
          %294 = sbr.rel (%p292) target = $region32
        $region31: #{tpu_custom_call.1} parent=11 // pred_region
          %s296 = ssub.s32 12288, 12288
          %297 = vsyncadd [#allocation9], %s296
          %s298 = sshll.u32 [#allocation10], 4
          %s299 = int_to_ptr.vmem [resolvable:$true] %s298
          %304 = dma.hbm_to_vmem [thread:$0]  %s7, 12288, %s299, [#allocation9], 384, 384, 24
        $region32: #{tpu_custom_call.1} parent=11 // pred_fallthru
          _
        // Predicated region
        $region33: #{tpu_custom_call.1} parent=11 // pred_check
          %p305 = pneg %p229
        $region34: #{tpu_custom_call.1} parent=11 // pred_check_branch
          %307 = sbr.rel (%p305) target = $region36
        $region35: #{tpu_custom_call.1} parent=11 // pred_region
          _
        $region36: #{tpu_custom_call.1} parent=11 // pred_fallthru
          _
      $region12: #{tpu_custom_call.1} parent=5 // pred_fallthru
        _
      %p308 = scmp.lt.s32.totalorder %s25, 2
      // Predicated region
      $region37: #{tpu_custom_call.1} parent=5 // pred_check
        %p309 = pneg %p308
      $region38: #{tpu_custom_call.1} parent=5 // pred_check_branch
        %311 = sbr.rel (%p309) target = $region40
      $region39: #{tpu_custom_call.1} parent=5 // pred_region
        // Predicated region
        $region41: #{tpu_custom_call.1} parent=39 // pred_check
          %p312 = pneg %p45
        $region42: #{tpu_custom_call.1} parent=39 // pred_check_branch
          %314 = sbr.rel (%p312) target = $region44
        $region43: #{tpu_custom_call.1} parent=39 // pred_region
          %s315 = sand.u32 %s35, 1
          %s316 = scalar_lea.sflag [#allocation3], %s315
          %s317 = sand.u32 %s35, 1
          %s318 = smul.addr %s317, 8
          %s319 = scalar_lea.vmem [#allocation2], %s318
          %s321 = ssub.s32 128, 128
          %322 = vsyncadd %s316, %s321
          %s323 = smul.addr %s25, 128
          %s324 = scalar_lea.hbm %s0, %s323
          %s326 = sshll.u32 %s319, 4
          %s327 = int_to_ptr.vmem [resolvable:$true] %s326
          %329 = dma.hbm_to_vmem [thread:$0]  %s324, 128, %s327, %s316
        $region44: #{tpu_custom_call.1} parent=39 // pred_fallthru
          _
        // Predicated region
        $region45: #{tpu_custom_call.1} parent=39 // pred_check
          %p330 = pneg %p71
        $region46: #{tpu_custom_call.1} parent=39 // pred_check_branch
          %332 = sbr.rel (%p330) target = $region48
        $region47: #{tpu_custom_call.1} parent=39 // pred_region
          %s333 = sand.u32 %s25, 1
          %s334 = scalar_lea.sflag [#allocation6], %s333
          %s335 = sand.u32 %s61, 1
          %s336 = smul.addr %s335, 8
          %s337 = scalar_lea.vmem [#allocation5], %s336
          %s339 = ssub.s32 128, 128
          %340 = vsyncadd %s334, %s339
          %s341 = smul.addr %s25, 128
          %s342 = scalar_lea.hbm %s1, %s341
          %s344 = sshll.u32 %s337, 4
          %s345 = int_to_ptr.vmem [resolvable:$true] %s344
          %347 = dma.hbm_to_vmem [thread:$0]  %s342, 128, %s345, %s334
        $region48: #{tpu_custom_call.1} parent=39 // pred_fallthru
          _
        // Predicated region
        $region49: #{tpu_custom_call.1} parent=39 // pred_check
          %p348 = pneg %p97
        $region50: #{tpu_custom_call.1} parent=39 // pred_check_branch
          %350 = sbr.rel (%p348) target = $region52
        $region51: #{tpu_custom_call.1} parent=39 // pred_region
          %s351 = sand.u32 %s25, 1
          %s352 = scalar_lea.sflag [#allocation6], %s351
          %s353 = sand.u32 %s87, 1
          %s354 = smul.addr %s353, 8
          %s355 = scalar_lea.vmem [#allocation7], %s354
          %s357 = ssub.s32 128, 128
          %358 = vsyncadd %s352, %s357
          %s359 = smul.addr %s25, 128
          %s360 = scalar_lea.hbm %s2, %s359
          %s362 = sshll.u32 %s355, 4
          %s363 = int_to_ptr.vmem [resolvable:$true] %s362
          %365 = dma.hbm_to_vmem [thread:$0]  %s360, 128, %s363, %s352
        $region52: #{tpu_custom_call.1} parent=39 // pred_fallthru
          _
      $region40: #{tpu_custom_call.1} parent=5 // pred_fallthru
        _
      %p366 = scmp.le.s32.totalorder 1, %s25
      %p367 = scmp.lt.s32.totalorder %s25, 3
      %p368 = pnand %p366, %p367
      %p369 = pneg %p368
      // Predicated region
      $region53: #{tpu_custom_call.1} parent=5 // pred_check
        _
      $region54: #{tpu_custom_call.1} parent=5 // pred_check_branch
        %371 = sbr.rel (%p368) target = $region56
      $region55: #{tpu_custom_call.1} parent=5 // pred_region
        %s372 = ssub.s32 %s25, 1
        %s373 = sand.u32 %s38, 1
        %s374 = scalar_lea.sflag [#allocation3], %s373
        %s375 = sand.u32 %s38, 1
        %s376 = smul.addr %s375, 8
        %s377 = scalar_lea.vmem [#allocation2], %s376
        // Predicated region
        $region57: #{tpu_custom_call.1} parent=55 // pred_check
          %p378 = pneg %p51
        $region58: #{tpu_custom_call.1} parent=55 // pred_check_branch
          %380 = sbr.rel (%p378) target = $region60
        $region59: #{tpu_custom_call.1} parent=55 // pred_region
          %381 = dma.done %s374, 128
        $region60: #{tpu_custom_call.1} parent=55 // pred_fallthru
          _
        %s382 = sand.u32 %s30, 1
        %s383 = scalar_lea.sflag [#allocation6], %s382
        %s384 = sand.u32 %s64, 1
        %s385 = smul.addr %s384, 8
        %s386 = scalar_lea.vmem [#allocation5], %s385
        // Predicated region
        $region61: #{tpu_custom_call.1} parent=55 // pred_check
          %p387 = pneg %p77
        $region62: #{tpu_custom_call.1} parent=55 // pred_check_branch
          %389 = sbr.rel (%p387) target = $region64
        $region63: #{tpu_custom_call.1} parent=55 // pred_region
          %390 = dma.done %s383, 128
        $region64: #{tpu_custom_call.1} parent=55 // pred_fallthru
          _
        %s391 = sand.u32 %s30, 1
        %s392 = scalar_lea.sflag [#allocation6], %s391
        %s393 = sand.u32 %s90, 1
        %s394 = smul.addr %s393, 8
        %s395 = scalar_lea.vmem [#allocation7], %s394
        // Predicated region
        $region65: #{tpu_custom_call.1} parent=55 // pred_check
          %p396 = pneg %p103
        $region66: #{tpu_custom_call.1} parent=55 // pred_check_branch
          %398 = sbr.rel (%p396) target = $region68
        $region67: #{tpu_custom_call.1} parent=55 // pred_region
          %399 = dma.done %s392, 128
        $region68: #{tpu_custom_call.1} parent=55 // pred_fallthru
          _
        // Predicated region
        $region69: #{tpu_custom_call.1} parent=55 // pred_check
          %p400 = pneg %p124
        $region70: #{tpu_custom_call.1} parent=55 // pred_check_branch
          %402 = sbr.rel (%p400) target = $region72
        $region71: #{tpu_custom_call.1} parent=55 // pred_region
          %403 = dma.done [#allocation9], 10240
        $region72: #{tpu_custom_call.1} parent=55 // pred_fallthru
          _
        // Predicated region
        $region73: #{tpu_custom_call.1} parent=55 // pred_check
          %p404 = pneg %p208
        $region74: #{tpu_custom_call.1} parent=55 // pred_check_branch
          %406 = sbr.rel (%p404) target = $region76
        $region75: #{tpu_custom_call.1} parent=55 // pred_region
          %407 = dma.done [#allocation9], 12288
        $region76: #{tpu_custom_call.1} parent=55 // pred_fallthru
          _
        %s408 = sand.u32 %s38, 1
        %s409 = scalar_lea.sflag [#allocation3], %s408
        %s410 = sand.u32 %s38, 1
        %s411 = smul.addr %s410, 8
        %s412 = scalar_lea.vmem [#allocation2], %s411
        %p413 = pneg %p51
        %p414 = pneg %p48
        %s415 = sand.u32 %s30, 1
        %s416 = scalar_lea.sflag [#allocation6], %s415
        %s417 = sand.u32 %s64, 1
        %s418 = smul.addr %s417, 8
        %s419 = scalar_lea.vmem [#allocation5], %s418
        %p420 = pneg %p77
        %p421 = pneg %p74
        %s422 = sand.u32 %s30, 1
        %s423 = scalar_lea.sflag [#allocation6], %s422
        %s424 = sand.u32 %s90, 1
        %s425 = smul.addr %s424, 8
        %s426 = scalar_lea.vmem [#allocation7], %s425
        %p427 = pneg %p103
        %p428 = pneg %p100
        %p429 = pneg %p124
        %p430 = pneg %p121
        %p431 = pneg %p145
        %p432 = pneg %p142
        %p433 = pneg %p166
        %p434 = pneg %p163
        %p435 = pneg %p187
        %p436 = pneg %p184
        %p437 = pneg %p208
        %p438 = pneg %p205
        %p439 = pneg %p229
        %p440 = pneg %p226
        %p441 = pneg %p255
        %p442 = pneg %p252
        %s443 = sand.u32 %s242, 1
        %s444 = scalar_lea.sflag [#allocation4], %s443
        %s445 = sand.u32 %s242, 1
        %s446 = smul.addr %s445, 8
        %s447 = scalar_lea.vmem [#allocation11], %s446
        %v448 = vld [vmem:[%s377] sm:$0xff]
        %v449 = vld [vmem:[%s386] sm:$0xff]
        %v450 = vld [vmem:[#allocation8] sm:$0xff]
        %v451 = vld [vmem:[#allocation8 + $0x8] sm:$0xff]
        %v452 = vld [vmem:[#allocation8 + $0x10] sm:$0xff]
        %v453 = vld [vmem:[#allocation8 + $0x18] sm:$0xff]
        %v454 = vld [vmem:[#allocation8 + $0x20] sm:$0xff]
        %v455 = vld [vmem:[#allocation8 + $0x28] sm:$0xff]
        %v456 = vld [vmem:[#allocation8 + $0x30] sm:$0xff]
        %v457 = vld [vmem:[#allocation8 + $0x38] sm:$0xff]
        %v458 = vld [vmem:[#allocation8 + $0x40] sm:$0xff]
        %v459 = vld [vmem:[#allocation8 + $0x48] sm:$0xff]
        %v460 = vld [vmem:[#allocation8 + $0x50] sm:$0xff]
        %v461 = vld [vmem:[#allocation8 + $0x58] sm:$0xff]
        %v462 = vld [vmem:[#allocation8 + $0x60] sm:$0xff]
        %v463 = vld [vmem:[#allocation8 + $0x68] sm:$0xff]
        %v464 = vld [vmem:[#allocation8 + $0x70] sm:$0xff]
        %v465 = vld [vmem:[#allocation8 + $0x78] sm:$0xff]
        %v466 = vld [vmem:[#allocation8 + $0x80] sm:$0xff]
        %v467 = vld [vmem:[#allocation8 + $0x88] sm:$0xff]
        %v468 = vld [vmem:[#allocation8 + $0x90] sm:$0xff]
        %v469 = vld [vmem:[#allocation8 + $0x98] sm:$0xff]
        %v470 = vld [vmem:[#allocation8 + $0xa0] sm:$0xff]
        %v471 = vld [vmem:[#allocation8 + $0xa8] sm:$0xff]
        %v472 = vld [vmem:[#allocation8 + $0xb0] sm:$0xff]
        %v473 = vld [vmem:[#allocation8 + $0xb8] sm:$0xff]
        %v474 = vld [vmem:[#allocation8 + $0xc0] sm:$0xff]
        %v475 = vld [vmem:[#allocation8 + $0xc8] sm:$0xff]
        %v476 = vld [vmem:[#allocation8 + $0xd0] sm:$0xff]
        %v477 = vld [vmem:[#allocation8 + $0xd8] sm:$0xff]
        %v478 = vld [vmem:[#allocation8 + $0xe0] sm:$0xff]
        %v479 = vld [vmem:[#allocation8 + $0xe8] sm:$0xff]
        %v480 = vld [vmem:[#allocation8 + $0xf0] sm:$0xff]
        %v481 = vld [vmem:[#allocation8 + $0xf8] sm:$0xff]
        %v482 = vld [vmem:[#allocation8 + $0x100] sm:$0xff]
        %v483 = vld [vmem:[#allocation8 + $0x108] sm:$0xff]
        %v484 = vld [vmem:[#allocation8 + $0x110] sm:$0xff]
        %v485 = vld [vmem:[#allocation8 + $0x118] sm:$0xff]
        %v486 = vld [vmem:[#allocation8 + $0x120] sm:$0xff]
        %v487 = vld [vmem:[#allocation8 + $0x128] sm:$0xff]
        %v488 = vld [vmem:[#allocation8 + $0x130] sm:$0xff]
        %v489 = vld [vmem:[#allocation8 + $0x138] sm:$0xff]
        %v490 = vld [vmem:[#allocation8 + $0x140] sm:$0xff]
        %v491 = vld [vmem:[#allocation8 + $0x148] sm:$0xff]
        %v492 = vld [vmem:[#allocation8 + $0x150] sm:$0xff]
        %v493 = vld [vmem:[#allocation8 + $0x158] sm:$0xff]
        %v494 = vld [vmem:[#allocation8 + $0x160] sm:$0xff]
        %v495 = vld [vmem:[#allocation8 + $0x168] sm:$0xff]
        %v496 = vld [vmem:[#allocation8 + $0x170] sm:$0xff]
        %v497 = vld [vmem:[#allocation8 + $0x178] sm:$0xff]
        %v498 = vld [vmem:[#allocation8 + $0x180] sm:$0xff]
        %v499 = vld [vmem:[#allocation8 + $0x188] sm:$0xff]
        %v500 = vld [vmem:[#allocation8 + $0x190] sm:$0xff]
        %v501 = vld [vmem:[#allocation8 + $0x198] sm:$0xff]
        %v502 = vld [vmem:[#allocation8 + $0x1a0] sm:$0xff]
        %v503 = vld [vmem:[#allocation8 + $0x1a8] sm:$0xff]
        %v504 = vld [vmem:[#allocation8 + $0x1b0] sm:$0xff]
        %v505 = vld [vmem:[#allocation8 + $0x1b8] sm:$0xff]
        %v506 = vld [vmem:[#allocation8 + $0x1c0] sm:$0xff]
        %v507 = vld [vmem:[#allocation8 + $0x1c8] sm:$0xff]
        %v508 = vld [vmem:[#allocation8 + $0x1d0] sm:$0xff]
        %v509 = vld [vmem:[#allocation8 + $0x1d8] sm:$0xff]
        %v510 = vld [vmem:[#allocation8 + $0x1e0] sm:$0xff]
        %v511 = vld [vmem:[#allocation8 + $0x1e8] sm:$0xff]
        %v512 = vld [vmem:[#allocation8 + $0x1f0] sm:$0xff]
        %v513 = vld [vmem:[#allocation8 + $0x1f8] sm:$0xff]
        %v514 = vld [vmem:[#allocation8 + $0x200] sm:$0xff]
        %v515 = vld [vmem:[#allocation8 + $0x208] sm:$0xff]
        %v516 = vld [vmem:[#allocation8 + $0x210] sm:$0xff]
        %v517 = vld [vmem:[#allocation8 + $0x218] sm:$0xff]
        %v518 = vld [vmem:[#allocation8 + $0x220] sm:$0xff]
        %v519 = vld [vmem:[#allocation8 + $0x228] sm:$0xff]
        %v520 = vld [vmem:[#allocation8 + $0x230] sm:$0xff]
        %v521 = vld [vmem:[#allocation8 + $0x238] sm:$0xff]
        %v522 = vld [vmem:[#allocation8 + $0x240] sm:$0xff]
        %v523 = vld [vmem:[#allocation8 + $0x248] sm:$0xff]
        %v524 = vld [vmem:[#allocation8 + $0x250] sm:$0xff]
        %v525 = vld [vmem:[#allocation8 + $0x258] sm:$0xff]
        %v526 = vld [vmem:[#allocation8 + $0x260] sm:$0xff]
        %v527 = vld [vmem:[#allocation8 + $0x268] sm:$0xff]
        %v528 = vld [vmem:[#allocation8 + $0x270] sm:$0xff]
        %v529 = vld [vmem:[#allocation8 + $0x278] sm:$0xff]
        %v530 = vld [vmem:[%s4] sm:$0x1f]
        %v531 = vld [vmem:[#allocation10] sm:$0xff]
        %v532 = vld [vmem:[#allocation10 + $0x8] sm:$0xff]
        %v533 = vld [vmem:[#allocation10 + $0x10] sm:$0xff]
        %v534 = vld [vmem:[#allocation10 + $0x18] sm:$0xff]
        %v535 = vld [vmem:[#allocation10 + $0x20] sm:$0xff]
        %v536 = vld [vmem:[#allocation10 + $0x28] sm:$0xff]
        %v537 = vld [vmem:[#allocation10 + $0x30] sm:$0xff]
        %v538 = vld [vmem:[#allocation10 + $0x38] sm:$0xff]
        %v539 = vld [vmem:[#allocation10 + $0x40] sm:$0xff]
        %v540 = vld [vmem:[#allocation10 + $0x48] sm:$0xff]
        %v541 = vld [vmem:[#allocation10 + $0x50] sm:$0xff]
        %v542 = vld [vmem:[#allocation10 + $0x58] sm:$0xff]
        %v543 = vld [vmem:[#allocation10 + $0x60] sm:$0xff]
        %v544 = vld [vmem:[#allocation10 + $0x68] sm:$0xff]
        %v545 = vld [vmem:[#allocation10 + $0x70] sm:$0xff]
        %v546 = vld [vmem:[#allocation10 + $0x78] sm:$0xff]
        %v547 = vld [vmem:[#allocation10 + $0x80] sm:$0xff]
        %v548 = vld [vmem:[#allocation10 + $0x88] sm:$0xff]
        %v549 = vld [vmem:[#allocation10 + $0x90] sm:$0xff]
        %v550 = vld [vmem:[#allocation10 + $0x98] sm:$0xff]
        %v551 = vld [vmem:[#allocation10 + $0xa0] sm:$0xff]
        %v552 = vld [vmem:[#allocation10 + $0xa8] sm:$0xff]
        %v553 = vld [vmem:[#allocation10 + $0xb0] sm:$0xff]
        %v554 = vld [vmem:[#allocation10 + $0xb8] sm:$0xff]
        %v555 = vld [vmem:[#allocation10 + $0xc0] sm:$0xff]
        %v556 = vld [vmem:[#allocation10 + $0xc8] sm:$0xff]
        %v557 = vld [vmem:[#allocation10 + $0xd0] sm:$0xff]
        %v558 = vld [vmem:[#allocation10 + $0xd8] sm:$0xff]
        %v559 = vld [vmem:[#allocation10 + $0xe0] sm:$0xff]
        %v560 = vld [vmem:[#allocation10 + $0xe8] sm:$0xff]
        %v561 = vld [vmem:[#allocation10 + $0xf0] sm:$0xff]
        %v562 = vld [vmem:[#allocation10 + $0xf8] sm:$0xff]
        %v563 = vld [vmem:[#allocation10 + $0x100] sm:$0xff]
        %v564 = vld [vmem:[#allocation10 + $0x108] sm:$0xff]
        %v565 = vld [vmem:[#allocation10 + $0x110] sm:$0xff]
        %v566 = vld [vmem:[#allocation10 + $0x118] sm:$0xff]
        %v567 = vld [vmem:[#allocation10 + $0x120] sm:$0xff]
        %v568 = vld [vmem:[#allocation10 + $0x128] sm:$0xff]
        %v569 = vld [vmem:[#allocation10 + $0x130] sm:$0xff]
        %v570 = vld [vmem:[#allocation10 + $0x138] sm:$0xff]
        %v571 = vld [vmem:[#allocation10 + $0x140] sm:$0xff]
        %v572 = vld [vmem:[#allocation10 + $0x148] sm:$0xff]
        %v573 = vld [vmem:[#allocation10 + $0x150] sm:$0xff]
        %v574 = vld [vmem:[#allocation10 + $0x158] sm:$0xff]
        %v575 = vld [vmem:[#allocation10 + $0x160] sm:$0xff]
        %v576 = vld [vmem:[#allocation10 + $0x168] sm:$0xff]
        %v577 = vld [vmem:[#allocation10 + $0x170] sm:$0xff]
        %v578 = vld [vmem:[#allocation10 + $0x178] sm:$0xff]
        %v579 = vld [vmem:[#allocation10 + $0x180] sm:$0xff]
        %v580 = vld [vmem:[#allocation10 + $0x188] sm:$0xff]
        %v581 = vld [vmem:[#allocation10 + $0x190] sm:$0xff]
        %v582 = vld [vmem:[#allocation10 + $0x198] sm:$0xff]
        %v583 = vld [vmem:[#allocation10 + $0x1a0] sm:$0xff]
        %v584 = vld [vmem:[#allocation10 + $0x1a8] sm:$0xff]
        %v585 = vld [vmem:[#allocation10 + $0x1b0] sm:$0xff]
        %v586 = vld [vmem:[#allocation10 + $0x1b8] sm:$0xff]
        %v587 = vld [vmem:[#allocation10 + $0x1c0] sm:$0xff]
        %v588 = vld [vmem:[#allocation10 + $0x1c8] sm:$0xff]
        %v589 = vld [vmem:[#allocation10 + $0x1d0] sm:$0xff]
        %v590 = vld [vmem:[#allocation10 + $0x1d8] sm:$0xff]
        %v591 = vld [vmem:[#allocation10 + $0x1e0] sm:$0xff]
        %v592 = vld [vmem:[#allocation10 + $0x1e8] sm:$0xff]
        %v593 = vld [vmem:[#allocation10 + $0x1f0] sm:$0xff]
        %v594 = vld [vmem:[#allocation10 + $0x1f8] sm:$0xff]
        %v595 = vld [vmem:[#allocation10 + $0x200] sm:$0xff]
        %v596 = vld [vmem:[#allocation10 + $0x208] sm:$0xff]
        %v597 = vld [vmem:[#allocation10 + $0x210] sm:$0xff]
        %v598 = vld [vmem:[#allocation10 + $0x218] sm:$0xff]
        %v599 = vld [vmem:[#allocation10 + $0x220] sm:$0xff]
        %v600 = vld [vmem:[#allocation10 + $0x228] sm:$0xff]
        %v601 = vld [vmem:[#allocation10 + $0x230] sm:$0xff]
        %v602 = vld [vmem:[#allocation10 + $0x238] sm:$0xff]
        %v603 = vld [vmem:[#allocation10 + $0x240] sm:$0xff]
        %v604 = vld [vmem:[#allocation10 + $0x248] sm:$0xff]
        %v605 = vld [vmem:[#allocation10 + $0x250] sm:$0xff]
        %v606 = vld [vmem:[#allocation10 + $0x258] sm:$0xff]
        %v607 = vld [vmem:[#allocation10 + $0x260] sm:$0xff]
        %v608 = vld [vmem:[#allocation10 + $0x268] sm:$0xff]
        %v609 = vld [vmem:[#allocation10 + $0x270] sm:$0xff]
        %v610 = vld [vmem:[#allocation10 + $0x278] sm:$0xff]
        %v611 = vld [vmem:[#allocation10 + $0x280] sm:$0xff]
        %v612 = vld [vmem:[#allocation10 + $0x288] sm:$0xff]
        %v613 = vld [vmem:[#allocation10 + $0x290] sm:$0xff]
        %v614 = vld [vmem:[#allocation10 + $0x298] sm:$0xff]
        %v615 = vld [vmem:[#allocation10 + $0x2a0] sm:$0xff]
        %v616 = vld [vmem:[#allocation10 + $0x2a8] sm:$0xff]
        %v617 = vld [vmem:[#allocation10 + $0x2b0] sm:$0xff]
        %v618 = vld [vmem:[#allocation10 + $0x2b8] sm:$0xff]
        %v619 = vld [vmem:[#allocation10 + $0x2c0] sm:$0xff]
        %v620 = vld [vmem:[#allocation10 + $0x2c8] sm:$0xff]
        %v621 = vld [vmem:[#allocation10 + $0x2d0] sm:$0xff]
        %v622 = vld [vmem:[#allocation10 + $0x2d8] sm:$0xff]
        %v623 = vld [vmem:[#allocation10 + $0x2e0] sm:$0xff]
        %v624 = vld [vmem:[#allocation10 + $0x2e8] sm:$0xff]
        %v625 = vld [vmem:[#allocation10 + $0x2f0] sm:$0xff]
        %v626 = vld [vmem:[#allocation10 + $0x2f8] sm:$0xff]
        %v627 = vld [vmem:[%s8] sm:$0x7]
        %v628 = vld [vmem:[%s5] sm:$0x1]
        %v630 = vlaneseq
        %v631 = vshrl.u32 %v630, 7
        %v632 = vsub.s32 0, %v631
        %v633 = vrot.slane %v628, %v632
        %v635 = vld [vmem:[%s6] sm:$0x1]
        %v637 = vlaneseq
        %v638 = vshrl.u32 %v637, 7
        %v639 = vsub.s32 0, %v638
        %v640 = vrot.slane %v635, %v639
        %v642 = vld [vmem:[%s395] sm:$0xff]
        %v644 = vlaneseq
        %v645 = vshrl.u32 %v644, 7
        %v646 = vsub.s32 0, %v645
        %v647 = vrot.slane %v530, %v646
        %v648 = vlaneseq
        %v649 = vshrl.u32 %v648, 7
        %v650 = vsub.s32 1, %v649
        %v651 = vrot.slane %v530, %v650
        %v652 = vlaneseq
        %v653 = vshrl.u32 %v652, 7
        %v654 = vsub.s32 2, %v653
        %v655 = vrot.slane %v530, %v654
        %v656 = vlaneseq
        %v657 = vshrl.u32 %v656, 7
        %v658 = vsub.s32 3, %v657
        %v659 = vrot.slane %v530, %v658
        %v660 = vlaneseq
        %v661 = vshrl.u32 %v660, 7
        %v662 = vsub.s32 4, %v661
        %v663 = vrot.slane %v530, %v662
        %669 = vmatprep.subr.mxu0 %v451
        %670 = vmatpush1.msra.mxu0 %v450
        %671 = vmatprep.subr.mxu0 %v456
        %672 = vmatpush1.msra.mxu0 %v455
        %673 = vmatprep.subr.mxu0 %v461
        %674 = vmatpush1.msra.mxu0 %v460
        %675 = vmatprep.subr.mxu0 %v466
        %676 = vmatpush1.msra.mxu0 %v465
        %677 = vmatprep.subr.mxu0 %v471
        %678 = vmatpush1.msra.mxu0 %v470
        %679 = vmatprep.subr.mxu0 %v476
        %680 = vmatpush1.msra.mxu0 %v475
        %681 = vmatprep.subr.mxu0 %v481
        %682 = vmatpush1.msra.mxu0 %v480
        %683 = vmatprep.subr.mxu0 %v486
        %684 = vmatpush1.msra.mxu0 %v485
        %685 = vmatprep.subr.mxu0 %v491
        %686 = vmatpush1.msra.mxu0 %v490
        %687 = vmatprep.subr.mxu0 %v496
        %688 = vmatpush1.msra.mxu0 %v495
        %689 = vmatprep.subr.mxu0 %v501
        %690 = vmatpush1.msra.mxu0 %v500
        %691 = vmatprep.subr.mxu0 %v506
        %692 = vmatpush1.msra.mxu0 %v505
        %693 = vmatprep.subr.mxu0 %v511
        %694 = vmatpush1.msra.mxu0 %v510
        %695 = vmatprep.subr.mxu0 %v516
        %696 = vmatpush1.msra.mxu0 %v515
        %697 = vmatprep.subr.mxu0 %v521
        %698 = vmatpush1.msra.mxu0 %v520
        %699 = vmatprep.subr.mxu0 %v526
        %700 = vmatpush1.msra.mxu0 %v525
        %701 = vmatprep.subr.mxu0 0.0
        %702 = vmatpush1.msra.mxu0 0.0
        %703 = vmatprep.subr.mxu0 0.0
        %704 = vmatpush1.msra.mxu0 0.0
        %705 = vmatprep.subr.mxu0 0.0
        %706 = vmatpush1.msra.mxu0 0.0
        %707 = vmatprep.subr.mxu0 0.0
        %708 = vmatpush1.msra.mxu0 0.0
        %709 = vmatprep.subr.mxu0 0.0
        %710 = vmatpush1.msra.mxu0 0.0
        %711 = vmatprep.subr.mxu0 0.0
        %712 = vmatpush1.msra.mxu0 0.0
        %713 = vmatprep.subr.mxu0 0.0
        %714 = vmatpush1.msra.mxu0 0.0
        %715 = vmatprep.subr.mxu0 0.0
        %716 = vmatpush1.msra.mxu0 0.0
        %717 = vmatprep.subr.mxu0 0.0
        %718 = vmatpush1.msra.mxu0 0.0
        %719 = vmatprep.subr.mxu0 0.0
        %720 = vmatpush1.msra.mxu0 0.0
        %721 = vmatprep.subr.mxu0 0.0
        %722 = vmatpush1.msra.mxu0 0.0
        %723 = vmatprep.subr.mxu0 0.0
        %724 = vmatpush1.msra.mxu0 0.0
        %725 = vmatprep.subr.mxu0 0.0
        %726 = vmatpush1.msra.mxu0 0.0
        %727 = vmatprep.subr.mxu0 0.0
        %728 = vmatpush1.msra.mxu0 0.0
        %729 = vmatprep.subr.mxu0 0.0
        %730 = vmatpush1.msra.mxu0 0.0
        %731 = vmatprep.subr.mxu0 0.0
        %732 = vmatpush1.msra.mxu0 0.0
        %733 = vmatprep.mubr.f32.mxu0 0.0
        %734 = vmatmul.mubr.f32.gmra.mrb[0].mxu0 %v642
        %v735 = vpop.f32.mrb[0].mxu0
        %v736 = vadd.f32 %v647, %v735
        %v737 = vpop.f32.mrb[0].mxu0
        %v738 = vadd.f32 %v651, %v737
        %739 = vdwg.mxu0
        %740 = vmatprep.subr.mxu0 %v453
        %741 = vmatpush1.msra.mxu0 %v452
        %742 = vmatprep.subr.mxu0 %v458
        %743 = vmatpush1.msra.mxu0 %v457
        %744 = vmatprep.subr.mxu0 %v463
        %745 = vmatpush1.msra.mxu0 %v462
        %746 = vmatprep.subr.mxu0 %v468
        %747 = vmatpush1.msra.mxu0 %v467
        %748 = vmatprep.subr.mxu0 %v473
        %749 = vmatpush1.msra.mxu0 %v472
        %750 = vmatprep.subr.mxu0 %v478
        %751 = vmatpush1.msra.mxu0 %v477
        %752 = vmatprep.subr.mxu0 %v483
        %753 = vmatpush1.msra.mxu0 %v482
        %754 = vmatprep.subr.mxu0 %v488
        %755 = vmatpush1.msra.mxu0 %v487
        %756 = vmatprep.subr.mxu0 %v493
        %757 = vmatpush1.msra.mxu0 %v492
        %758 = vmatprep.subr.mxu0 %v498
        %759 = vmatpush1.msra.mxu0 %v497
        %760 = vmatprep.subr.mxu0 %v503
        %761 = vmatpush1.msra.mxu0 %v502
        %762 = vmatprep.subr.mxu0 %v508
        %763 = vmatpush1.msra.mxu0 %v507
        %764 = vmatprep.subr.mxu0 %v513
        %765 = vmatpush1.msra.mxu0 %v512
        %766 = vmatprep.subr.mxu0 %v518
        %767 = vmatpush1.msra.mxu0 %v517
        %768 = vmatprep.subr.mxu0 %v523
        %769 = vmatpush1.msra.mxu0 %v522
        %770 = vmatprep.subr.mxu0 %v528
        %771 = vmatpush1.msra.mxu0 %v527
        %772 = vmatprep.subr.mxu0 0.0
        %773 = vmatpush1.msra.mxu0 0.0
        %774 = vmatprep.subr.mxu0 0.0
        %775 = vmatpush1.msra.mxu0 0.0
        %776 = vmatprep.subr.mxu0 0.0
        %777 = vmatpush1.msra.mxu0 0.0
        %778 = vmatprep.subr.mxu0 0.0
        %779 = vmatpush1.msra.mxu0 0.0
        %780 = vmatprep.subr.mxu0 0.0
        %781 = vmatpush1.msra.mxu0 0.0
        %782 = vmatprep.subr.mxu0 0.0
        %783 = vmatpush1.msra.mxu0 0.0
        %784 = vmatprep.subr.mxu0 0.0
        %785 = vmatpush1.msra.mxu0 0.0
        %786 = vmatprep.subr.mxu0 0.0
        %787 = vmatpush1.msra.mxu0 0.0
        %788 = vmatprep.subr.mxu0 0.0
        %789 = vmatpush1.msra.mxu0 0.0
        %790 = vmatprep.subr.mxu0 0.0
        %791 = vmatpush1.msra.mxu0 0.0
        %792 = vmatprep.subr.mxu0 0.0
        %793 = vmatpush1.msra.mxu0 0.0
        %794 = vmatprep.subr.mxu0 0.0
        %795 = vmatpush1.msra.mxu0 0.0
        %796 = vmatprep.subr.mxu0 0.0
        %797 = vmatpush1.msra.mxu0 0.0
        %798 = vmatprep.subr.mxu0 0.0
        %799 = vmatpush1.msra.mxu0 0.0
        %800 = vmatprep.subr.mxu0 0.0
        %801 = vmatpush1.msra.mxu0 0.0
        %802 = vmatprep.subr.mxu0 0.0
        %803 = vmatpush1.msra.mxu0 0.0
        %804 = vmatprep.mubr.f32.mxu0 0.0
        %805 = vmatmul.mubr.f32.gmra.mrb[0].mxu0 %v642
        %v806 = vpop.f32.mrb[0].mxu0
        %v807 = vadd.f32 %v655, %v806
        %v808 = vpop.f32.mrb[0].mxu0
        %v809 = vadd.f32 %v659, %v808
        %810 = vdwg.mxu0
        %811 = vmatprep.subr.mxu0 0.0
        %812 = vmatpush1.msra.mxu0 %v454
        %813 = vmatprep.subr.mxu0 0.0
        %814 = vmatpush1.msra.mxu0 %v459
        %815 = vmatprep.subr.mxu0 0.0
        %816 = vmatpush1.msra.mxu0 %v464
        %817 = vmatprep.subr.mxu0 0.0
        %818 = vmatpush1.msra.mxu0 %v469
        %819 = vmatprep.subr.mxu0 0.0
        %820 = vmatpush1.msra.mxu0 %v474
        %821 = vmatprep.subr.mxu0 0.0
        %822 = vmatpush1.msra.mxu0 %v479
        %823 = vmatprep.subr.mxu0 0.0
        %824 = vmatpush1.msra.mxu0 %v484
        %825 = vmatprep.subr.mxu0 0.0
        %826 = vmatpush1.msra.mxu0 %v489
        %827 = vmatprep.subr.mxu0 0.0
        %828 = vmatpush1.msra.mxu0 %v494
        %829 = vmatprep.subr.mxu0 0.0
        %830 = vmatpush1.msra.mxu0 %v499
        %831 = vmatprep.subr.mxu0 0.0
        %832 = vmatpush1.msra.mxu0 %v504
        %833 = vmatprep.subr.mxu0 0.0
        %834 = vmatpush1.msra.mxu0 %v509
        %835 = vmatprep.subr.mxu0 0.0
        %836 = vmatpush1.msra.mxu0 %v514
        %837 = vmatprep.subr.mxu0 0.0
        %838 = vmatpush1.msra.mxu0 %v519
        %839 = vmatprep.subr.mxu0 0.0
        %840 = vmatpush1.msra.mxu0 %v524
        %841 = vmatprep.subr.mxu0 0.0
        %842 = vmatpush1.msra.mxu0 %v529
        %843 = vmatprep.subr.mxu0 0.0
        %844 = vmatpush1.msra.mxu0 0.0
        %845 = vmatprep.subr.mxu0 0.0
        %846 = vmatpush1.msra.mxu0 0.0
        %847 = vmatprep.subr.mxu0 0.0
        %848 = vmatpush1.msra.mxu0 0.0
        %849 = vmatprep.subr.mxu0 0.0
        %850 = vmatpush1.msra.mxu0 0.0
        %851 = vmatprep.subr.mxu0 0.0
        %852 = vmatpush1.msra.mxu0 0.0
        %853 = vmatprep.subr.mxu0 0.0
        %854 = vmatpush1.msra.mxu0 0.0
        %855 = vmatprep.subr.mxu0 0.0
        %856 = vmatpush1.msra.mxu0 0.0
        %857 = vmatprep.subr.mxu0 0.0
        %858 = vmatpush1.msra.mxu0 0.0
        %859 = vmatprep.subr.mxu0 0.0
        %860 = vmatpush1.msra.mxu0 0.0
        %861 = vmatprep.subr.mxu0 0.0
        %862 = vmatpush1.msra.mxu0 0.0
        %863 = vmatprep.subr.mxu0 0.0
        %864 = vmatpush1.msra.mxu0 0.0
        %865 = vmatprep.subr.mxu0 0.0
        %866 = vmatpush1.msra.mxu0 0.0
        %867 = vmatprep.subr.mxu0 0.0
        %868 = vmatpush1.msra.mxu0 0.0
        %869 = vmatprep.subr.mxu0 0.0
        %870 = vmatpush1.msra.mxu0 0.0
        %871 = vmatprep.subr.mxu0 0.0
        %872 = vmatpush1.msra.mxu0 0.0
        %873 = vmatprep.subr.mxu0 0.0
        %874 = vmatpush1.msra.mxu0 0.0
        %875 = vmatprep.mubr.f32.mxu0 0.0
        %876 = vmatmul.mubr.f32.gmra.mrb[0].mxu0 %v642
        %v877 = vpop.f32.mrb[0].mxu0
        %v878 = vadd.f32 %v663, %v877
        %v879 = vpop.f32.mrb[0].mxu0
        %880 = vdwg.mxu0
        %882 = vset.pattern.permute.xlu0 0
        %883 = vperm.xlu0 %882, %v448
        %v884 = vpop.permute.xlu0 %883
        %v886 = vlaneseq
        %v887 = vshrl.u32 %v886, 7
        %v888 = vsub.s32 0, %v887
        %v889 = vrot.slane %v736, %v888
        %v890 = vmul.f32 %v884, %v889
        %v891 = vadd.f32 %v633, %v890
        %893 = vset.pattern.permute.xlu0 0
        %894 = vperm.xlu0 %893, %v449
        %v895 = vpop.permute.xlu0 %894
        %v897 = vlaneseq
        %v898 = vshrl.u32 %v897, 7
        %v899 = vsub.s32 0, %v898
        %v900 = vrot.slane %v738, %v899
        %v901 = vmul.f32 %v895, %v900
        %v902 = vadd.f32 %v640, %v901
        %903 = vset.pattern.permute.xlu0 1
        %904 = vperm.xlu0 %903, %v448
        %v905 = vpop.permute.xlu0 %904
        %v907 = vlaneseq
        %v908 = vshrl.u32 %v907, 7
        %v909 = vsub.s32 1, %v908
        %v910 = vrot.slane %v736, %v909
        %v911 = vmul.f32 %v905, %v910
        %v912 = vadd.f32 %v891, %v911
        %913 = vset.pattern.permute.xlu0 1
        %914 = vperm.xlu0 %913, %v449
        %v915 = vpop.permute.xlu0 %914
        %v917 = vlaneseq
        %v918 = vshrl.u32 %v917, 7
        %v919 = vsub.s32 1, %v918
        %v920 = vrot.slane %v738, %v919
        %v921 = vmul.f32 %v915, %v920
        %v922 = vadd.f32 %v902, %v921
        %923 = vset.pattern.permute.xlu0 2
        %924 = vperm.xlu0 %923, %v448
        %v925 = vpop.permute.xlu0 %924
        %v927 = vlaneseq
        %v928 = vshrl.u32 %v927, 7
        %v929 = vsub.s32 2, %v928
        %v930 = vrot.slane %v736, %v929
        %v931 = vmul.f32 %v925, %v930
        %v932 = vadd.f32 %v912, %v931
        %933 = vset.pattern.permute.xlu0 2
        %934 = vperm.xlu0 %933, %v449
        %v935 = vpop.permute.xlu0 %934
        %v937 = vlaneseq
        %v938 = vshrl.u32 %v937, 7
        %v939 = vsub.s32 2, %v938
        %v940 = vrot.slane %v738, %v939
        %v941 = vmul.f32 %v935, %v940
        %v942 = vadd.f32 %v922, %v941
        %943 = vset.pattern.permute.xlu0 3
        %944 = vperm.xlu0 %943, %v448
        %v945 = vpop.permute.xlu0 %944
        %v947 = vlaneseq
        %v948 = vshrl.u32 %v947, 7
        %v949 = vsub.s32 3, %v948
        %v950 = vrot.slane %v736, %v949
        %v951 = vmul.f32 %v945, %v950
        %v952 = vadd.f32 %v932, %v951
        %953 = vset.pattern.permute.xlu0 3
        %954 = vperm.xlu0 %953, %v449
        %v955 = vpop.permute.xlu0 %954
        %v957 = vlaneseq
        %v958 = vshrl.u32 %v957, 7
        %v959 = vsub.s32 3, %v958
        %v960 = vrot.slane %v738, %v959
        %v961 = vmul.f32 %v955, %v960
        %v962 = vadd.f32 %v942, %v961
        %963 = vset.pattern.permute.xlu0 4
        %964 = vperm.xlu0 %963, %v448
        %v965 = vpop.permute.xlu0 %964
        %v967 = vlaneseq
        %v968 = vshrl.u32 %v967, 7
        %v969 = vsub.s32 4, %v968
        %v970 = vrot.slane %v736, %v969
        %v971 = vmul.f32 %v965, %v970
        %v972 = vadd.f32 %v952, %v971
        %973 = vset.pattern.permute.xlu0 4
        %974 = vperm.xlu0 %973, %v449
        %v975 = vpop.permute.xlu0 %974
        %v977 = vlaneseq
        %v978 = vshrl.u32 %v977, 7
        %v979 = vsub.s32 4, %v978
        %v980 = vrot.slane %v738, %v979
        %v981 = vmul.f32 %v975, %v980
        %v982 = vadd.f32 %v962, %v981
        %983 = vset.pattern.permute.xlu0 5
        %984 = vperm.xlu0 %983, %v448
        %v985 = vpop.permute.xlu0 %984
        %v987 = vlaneseq
        %v988 = vshrl.u32 %v987, 7
        %v989 = vsub.s32 5, %v988
        %v990 = vrot.slane %v736, %v989
        %v991 = vmul.f32 %v985, %v990
        %v992 = vadd.f32 %v972, %v991
        %993 = vset.pattern.permute.xlu0 5
        %994 = vperm.xlu0 %993, %v449
        %v995 = vpop.permute.xlu0 %994
        %v997 = vlaneseq
        %v998 = vshrl.u32 %v997, 7
        %v999 = vsub.s32 5, %v998
        %v1000 = vrot.slane %v738, %v999
        %v1001 = vmul.f32 %v995, %v1000
        %v1002 = vadd.f32 %v982, %v1001
        %1003 = vset.pattern.permute.xlu0 6
        %1004 = vperm.xlu0 %1003, %v448
        %v1005 = vpop.permute.xlu0 %1004
        %v1007 = vlaneseq
        %v1008 = vshrl.u32 %v1007, 7
        %v1009 = vsub.s32 6, %v1008
        %v1010 = vrot.slane %v736, %v1009
        %v1011 = vmul.f32 %v1005, %v1010
        %v1012 = vadd.f32 %v992, %v1011
        %1013 = vset.pattern.permute.xlu0 6
        %1014 = vperm.xlu0 %1013, %v449
        %v1015 = vpop.permute.xlu0 %1014
        %v1017 = vlaneseq
        %v1018 = vshrl.u32 %v1017, 7
        %v1019 = vsub.s32 6, %v1018
        %v1020 = vrot.slane %v738, %v1019
        %v1021 = vmul.f32 %v1015, %v1020
        %v1022 = vadd.f32 %v1002, %v1021
        %1023 = vset.pattern.permute.xlu0 7
        %1024 = vperm.xlu0 %1023, %v448
        %v1025 = vpop.permute.xlu0 %1024
        %v1027 = vlaneseq
        %v1028 = vshrl.u32 %v1027, 7
        %v1029 = vsub.s32 7, %v1028
        %v1030 = vrot.slane %v736, %v1029
        %v1031 = vmul.f32 %v1025, %v1030
        %v1032 = vadd.f32 %v1012, %v1031
        %1033 = vset.pattern.permute.xlu0 7
        %1034 = vperm.xlu0 %1033, %v449
        %v1035 = vpop.permute.xlu0 %1034
        %v1037 = vlaneseq
        %v1038 = vshrl.u32 %v1037, 7
        %v1039 = vsub.s32 7, %v1038
        %v1040 = vrot.slane %v738, %v1039
        %v1041 = vmul.f32 %v1035, %v1040
        %v1042 = vadd.f32 %v1022, %v1041
        %v1044 = vlaneseq
        %v1045 = vshrl.u32 %v1044, 7
        %v1046 = vsub.s32 0, %v1045
        %v1047 = vrot.slane %v627, %v1046
        %v1048 = vlaneseq
        %v1049 = vshrl.u32 %v1048, 7
        %v1050 = vsub.s32 1, %v1049
        %v1051 = vrot.slane %v627, %v1050
        %v1052 = vlaneseq
        %v1053 = vshrl.u32 %v1052, 7
        %v1054 = vsub.s32 2, %v1053
        %v1055 = vrot.slane %v627, %v1054
        %1059 = vmatprep.subr.mxu0 %v532
        %1060 = vmatpush1.msra.mxu0 %v531
        %1061 = vmatprep.subr.mxu0 %v535
        %1062 = vmatpush1.msra.mxu0 %v534
        %1063 = vmatprep.subr.mxu0 %v538
        %1064 = vmatpush1.msra.mxu0 %v537
        %1065 = vmatprep.subr.mxu0 %v541
        %1066 = vmatpush1.msra.mxu0 %v540
        %1067 = vmatprep.subr.mxu0 %v544
        %1068 = vmatpush1.msra.mxu0 %v543
        %1069 = vmatprep.subr.mxu0 %v547
        %1070 = vmatpush1.msra.mxu0 %v546
        %1071 = vmatprep.subr.mxu0 %v550
        %1072 = vmatpush1.msra.mxu0 %v549
        %1073 = vmatprep.subr.mxu0 %v553
        %1074 = vmatpush1.msra.mxu0 %v552
        %1075 = vmatprep.subr.mxu0 %v556
        %1076 = vmatpush1.msra.mxu0 %v555
        %1077 = vmatprep.subr.mxu0 %v559
        %1078 = vmatpush1.msra.mxu0 %v558
        %1079 = vmatprep.subr.mxu0 %v562
        %1080 = vmatpush1.msra.mxu0 %v561
        %1081 = vmatprep.subr.mxu0 %v565
        %1082 = vmatpush1.msra.mxu0 %v564
        %1083 = vmatprep.subr.mxu0 %v568
        %1084 = vmatpush1.msra.mxu0 %v567
        %1085 = vmatprep.subr.mxu0 %v571
        %1086 = vmatpush1.msra.mxu0 %v570
        %1087 = vmatprep.subr.mxu0 %v574
        %1088 = vmatpush1.msra.mxu0 %v573
        %1089 = vmatprep.subr.mxu0 %v577
        %1090 = vmatpush1.msra.mxu0 %v576
        %1091 = vmatprep.subr.mxu0 %v580
        %1092 = vmatpush1.msra.mxu0 %v579
        %1093 = vmatprep.subr.mxu0 %v583
        %1094 = vmatpush1.msra.mxu0 %v582
        %1095 = vmatprep.subr.mxu0 %v586
        %1096 = vmatpush1.msra.mxu0 %v585
        %1097 = vmatprep.subr.mxu0 %v589
        %1098 = vmatpush1.msra.mxu0 %v588
        %1099 = vmatprep.subr.mxu0 %v592
        %1100 = vmatpush1.msra.mxu0 %v591
        %1101 = vmatprep.subr.mxu0 %v595
        %1102 = vmatpush1.msra.mxu0 %v594
        %1103 = vmatprep.subr.mxu0 %v598
        %1104 = vmatpush1.msra.mxu0 %v597
        %1105 = vmatprep.subr.mxu0 %v601
        %1106 = vmatpush1.msra.mxu0 %v600
        %1107 = vmatprep.subr.mxu0 %v604
        %1108 = vmatpush1.msra.mxu0 %v603
        %1109 = vmatprep.subr.mxu0 %v607
        %1110 = vmatpush1.msra.mxu0 %v606
        %1111 = vmatprep.subr.mxu0 %v610
        %1112 = vmatpush1.msra.mxu0 %v609
        %1113 = vmatprep.subr.mxu0 %v613
        %1114 = vmatpush1.msra.mxu0 %v612
        %1115 = vmatprep.subr.mxu0 %v616
        %1116 = vmatpush1.msra.mxu0 %v615
        %1117 = vmatprep.subr.mxu0 %v619
        %1118 = vmatpush1.msra.mxu0 %v618
        %1119 = vmatprep.subr.mxu0 %v622
        %1120 = vmatpush1.msra.mxu0 %v621
        %1121 = vmatprep.subr.mxu0 %v625
        %1122 = vmatpush1.msra.mxu0 %v624
        %1123 = vmatprep.mubr.f32.mxu0 %v1042
        %1124 = vmatmul.mubr.f32.gmra.mrb[0].mxu0 %v1032
        %v1125 = vpop.f32.mrb[0].mxu0
        %v1126 = vadd.f32 %v1047, %v1125
        %v1127 = vpop.f32.mrb[0].mxu0
        %v1128 = vadd.f32 %v1051, %v1127
        %1129 = vdwg.mxu0
        %1130 = vmatprep.subr.mxu0 0.0
        %1131 = vmatpush1.msra.mxu0 %v533
        %1132 = vmatprep.subr.mxu0 0.0
        %1133 = vmatpush1.msra.mxu0 %v536
        %1134 = vmatprep.subr.mxu0 0.0
        %1135 = vmatpush1.msra.mxu0 %v539
        %1136 = vmatprep.subr.mxu0 0.0
        %1137 = vmatpush1.msra.mxu0 %v542
        %1138 = vmatprep.subr.mxu0 0.0
        %1139 = vmatpush1.msra.mxu0 %v545
        %1140 = vmatprep.subr.mxu0 0.0
        %1141 = vmatpush1.msra.mxu0 %v548
        %1142 = vmatprep.subr.mxu0 0.0
        %1143 = vmatpush1.msra.mxu0 %v551
        %1144 = vmatprep.subr.mxu0 0.0
        %1145 = vmatpush1.msra.mxu0 %v554
        %1146 = vmatprep.subr.mxu0 0.0
        %1147 = vmatpush1.msra.mxu0 %v557
        %1148 = vmatprep.subr.mxu0 0.0
        %1149 = vmatpush1.msra.mxu0 %v560
        %1150 = vmatprep.subr.mxu0 0.0
        %1151 = vmatpush1.msra.mxu0 %v563
        %1152 = vmatprep.subr.mxu0 0.0
        %1153 = vmatpush1.msra.mxu0 %v566
        %1154 = vmatprep.subr.mxu0 0.0
        %1155 = vmatpush1.msra.mxu0 %v569
        %1156 = vmatprep.subr.mxu0 0.0
        %1157 = vmatpush1.msra.mxu0 %v572
        %1158 = vmatprep.subr.mxu0 0.0
        %1159 = vmatpush1.msra.mxu0 %v575
        %1160 = vmatprep.subr.mxu0 0.0
        %1161 = vmatpush1.msra.mxu0 %v578
        %1162 = vmatprep.subr.mxu0 0.0
        %1163 = vmatpush1.msra.mxu0 %v581
        %1164 = vmatprep.subr.mxu0 0.0
        %1165 = vmatpush1.msra.mxu0 %v584
        %1166 = vmatprep.subr.mxu0 0.0
        %1167 = vmatpush1.msra.mxu0 %v587
        %1168 = vmatprep.subr.mxu0 0.0
        %1169 = vmatpush1.msra.mxu0 %v590
        %1170 = vmatprep.subr.mxu0 0.0
        %1171 = vmatpush1.msra.mxu0 %v593
        %1172 = vmatprep.subr.mxu0 0.0
        %1173 = vmatpush1.msra.mxu0 %v596
        %1174 = vmatprep.subr.mxu0 0.0
        %1175 = vmatpush1.msra.mxu0 %v599
        %1176 = vmatprep.subr.mxu0 0.0
        %1177 = vmatpush1.msra.mxu0 %v602
        %1178 = vmatprep.subr.mxu0 0.0
        %1179 = vmatpush1.msra.mxu0 %v605
        %1180 = vmatprep.subr.mxu0 0.0
        %1181 = vmatpush1.msra.mxu0 %v608
        %1182 = vmatprep.subr.mxu0 0.0
        %1183 = vmatpush1.msra.mxu0 %v611
        %1184 = vmatprep.subr.mxu0 0.0
        %1185 = vmatpush1.msra.mxu0 %v614
        %1186 = vmatprep.subr.mxu0 0.0
        %1187 = vmatpush1.msra.mxu0 %v617
        %1188 = vmatprep.subr.mxu0 0.0
        %1189 = vmatpush1.msra.mxu0 %v620
        %1190 = vmatprep.subr.mxu0 0.0
        %1191 = vmatpush1.msra.mxu0 %v623
        %1192 = vmatprep.subr.mxu0 0.0
        %1193 = vmatpush1.msra.mxu0 %v626
        %1194 = vmatprep.mubr.f32.mxu0 %v1042
        %1195 = vmatmul.mubr.f32.gmra.mrb[0].mxu0 %v1032
        %v1196 = vpop.f32.mrb[0].mxu0
        %v1197 = vadd.f32 %v1055, %v1196
        %v1198 = vpop.f32.mrb[0].mxu0
        %1199 = vdwg.mxu0
        %v1200 = vadd.f32 %v1126, %v807
        %v1201 = vxor.u32 %v1200, 2147483648
        %v1202 = vmul.f32 %v1201, 1.442695
        %v1203 = vpow.pop %v1202
        %v1204 = vadd.f32 %v1203, 1.0
        %v1205 = vrcp.pop %v1204
        %v1206 = vmul.f32 1.0, %v1205
        %v1207 = vadd.f32 %v1128, %v809
        %v1208 = vxor.u32 %v1207, 2147483648
        %v1209 = vmul.f32 %v1208, 1.442695
        %v1210 = vpow.pop %v1209
        %v1211 = vadd.f32 %v1210, 1.0
        %v1212 = vrcp.pop %v1211
        %v1213 = vmul.f32 1.0, %v1212
        %v1214 = vmul.f32 %v1206, %v878
        %v1215 = vadd.f32 %v1197, %v1214
        %v1216 = vtanh.pop %v1215
        %v1217 = vsub.f32 %v642, %v1216
        %v1218 = vmul.f32 %v1213, %v1217
        %v1219 = vadd.f32 %v1216, %v1218
        %1220 = vst [vmem:[%s447] sm:$0xff] %v1219
        %s1221 = sand.u32 %s242, 1
        %s1222 = scalar_lea.sflag [#allocation4], %s1221
        %s1223 = sand.u32 %s242, 1
        %s1224 = smul.addr %s1223, 8
        %s1225 = scalar_lea.vmem [#allocation11], %s1224
        // Predicated region
        $region77: #{tpu_custom_call.1} parent=55 // pred_check
          %p1226 = pneg %p252
        $region78: #{tpu_custom_call.1} parent=55 // pred_check_branch
          %1228 = sbr.rel (%p1226) target = $region80
        $region79: #{tpu_custom_call.1} parent=55 // pred_region
          %s1230 = ssub.s32 128, 128
          %1231 = vsyncadd %s1222, %s1230
          %s1232 = smul.addr %s30, 128
          %s1233 = scalar_lea.hbm %s9, %s1232
          %s1235 = sshll.u32 %s1225, 4
          %s1236 = int_to_ptr.vmem [resolvable:$true] %s1235
          %1238 = dma.vmem_to_hbm [thread:$0]  %s1236, 128, %s1233, %s1222
        $region80: #{tpu_custom_call.1} parent=55 // pred_fallthru
          _
      $region56: #{tpu_custom_call.1} parent=5 // pred_fallthru
        _
      %p1239 = scmp.le.s32.totalorder 2, %s25
      // Predicated region
      $region81: #{tpu_custom_call.1} parent=5 // pred_check
        %p1240 = pneg %p1239
      $region82: #{tpu_custom_call.1} parent=5 // pred_check_branch
        %1242 = sbr.rel (%p1240) target = $region84
      $region83: #{tpu_custom_call.1} parent=5 // pred_region
        %s1243 = ssub.s32 %s25, 2
        // Predicated region
        $region85: #{tpu_custom_call.1} parent=83 // pred_check
          %p1244 = pneg %p258
        $region86: #{tpu_custom_call.1} parent=83 // pred_check_branch
          %1246 = sbr.rel (%p1244) target = $region88
        $region87: #{tpu_custom_call.1} parent=83 // pred_region
          %s1247 = sand.u32 %s243, 1
          %s1248 = scalar_lea.sflag [#allocation4], %s1247
          %s1249 = sand.u32 %s243, 1
          %s1250 = smul.addr %s1249, 8
          %s1251 = scalar_lea.vmem [#allocation11], %s1250
          %1252 = dma.done %s1248, 128
        $region88: #{tpu_custom_call.1} parent=83 // pred_fallthru
          _
      $region84: #{tpu_custom_call.1} parent=5 // pred_fallthru
        _
    $region6: #{tpu_custom_call.1} parent=1 // loop_footer
      %s29 = sadd.s32 1, %s25
    $region7: #{tpu_custom_call.1} parent=1 // loop_footer_branch
      %24 = sbr.rel target = $region3
    $region8: #{tpu_custom_call.1} parent=1 // loop_exit
      _
    %1253 = vsyncpa [#allocation3], 1
    %s1254 = scalar_lea.sflag [#allocation3], 1
    %1255 = vsyncpa %s1254, 1
    %1256 = vsyncpa [#allocation6], 1
    %s1257 = scalar_lea.sflag [#allocation6], 1
    %1258 = vsyncpa %s1257, 1
    %1259 = vsyncpa [#allocation9], 1
    %1260 = vsyncpa [#allocation4], 1
    %s1261 = scalar_lea.sflag [#allocation4], 1
    %1262 = vsyncpa %s1261, 1

</llo_original>
